<compile_context>
chip_gen: v7x
topology: tpu7x:2x2x1
jax: 0.10.0
libtpu: 0.0.40
codegen_flags: <defaults>
</compile_context>

<pallas_src>
import functools

import jax
import jax.numpy as jnp
from jax import lax
from jax.experimental import pallas as pl
from jax.experimental.pallas import tpu as pltpu

EPS = 1e-5      # PyTorch BatchNorm1d default eps
LANE = 128      # TPU lane width: channel dims are padded to a multiple of this


def _seq_pos_rows(tile_n, seq_len):
    """(tile_n*seq_len, 1) int32: position-in-sequence of each flattened row."""
    pos = lax.broadcasted_iota(jnp.int32, (seq_len, 1), 0)
    return jnp.broadcast_to(pos[None], (tile_n, seq_len, 1)).reshape(
        tile_n * seq_len, 1)


def _conv_same_rows(x2d, wp_ref, l_idx, seq_len, out_ch, compute_dtype):
    """'Same' 1-D conv on flattened (sequence-major) rows.

    x2d    : (M, Cin) activations, rows ordered (sequence, position).
    wp_ref : (Cin, K*out_ch) weights; tap k lives at lanes [k*out_ch, (k+1)*out_ch).
    l_idx  : (M, 1) int32 position of each row inside its sequence.
    Returns (M, out_ch) float32.
    """
    m = x2d.shape[0]
    k_taps = wp_ref.shape[1] // out_ch
    pad = (k_taps - 1) // 2

    # One big MXU matmul for all taps, f32 accumulation.
    y = jnp.dot(x2d.astype(compute_dtype), wp_ref[...].astype(compute_dtype),
                preferred_element_type=jnp.float32)            # (M, K*out_ch)

    acc = None
    for k in range(k_taps):
        yk = y[:, k * out_ch:(k + 1) * out_ch]                 # lane-aligned slice
        d = pad - k                                            # row shift for tap k
        if d != 0:
            # out[l] += tap_k(x[l - d]): shift the tap output by d rows via the
            # XLU (cheap), then zero rows whose source falls outside the sequence.
            yk = pltpu.roll(yk, shift=d % m, axis=0)
            if d > 0:
                yk = jnp.where(l_idx < d, 0.0, yk)
            else:
                yk = jnp.where(l_idx >= seq_len + d, 0.0, yk)
        acc = yk if acc is None else acc + yk
    return acc


def _sum_sumsq(y):
    """(1, 2, F) per-tile [sum; sum-of-squares] over rows (one-pass BN stats)."""
    return jnp.concatenate([jnp.sum(y, axis=0, keepdims=True),
                            jnp.sum(y * y, axis=0, keepdims=True)], axis=0)[None]


def _conv1_stats_kernel(x_ref, wp_ref, y_ref, st_ref, *, compute_dtype):
    tile_n, seq_len, cin = x_ref.shape
    fout = y_ref.shape[-1]
    m = tile_n * seq_len
    x2d = x_ref[...].reshape(m, cin)
    l_idx = _seq_pos_rows(tile_n, seq_len)
    y = _conv_same_rows(x2d, wp_ref, l_idx, seq_len, fout, compute_dtype)
    y_ref[...] = y.reshape(tile_n, seq_len, fout)
    st_ref[...] = _sum_sumsq(y)


def _bn_relu_conv2_stats_kernel(y1_ref, p1_ref, wp_ref, y2_ref, st_ref, *,
                                compute_dtype):
    tile_n, seq_len, fin = y1_ref.shape
    fout = y2_ref.shape[-1]
    m = tile_n * seq_len
    p1 = p1_ref[...]                                    # (2, F): [scale; shift]
    h = jnp.maximum(y1_ref[...].reshape(m, fin) * p1[0:1, :] + p1[1:2, :], 0.0)
    l_idx = _seq_pos_rows(tile_n, seq_len)
    y = _conv_same_rows(h, wp_ref, l_idx, seq_len, fout, compute_dtype)
    y2_ref[...] = y.reshape(tile_n, seq_len, fout)
    st_ref[...] = _sum_sumsq(y)


def _bn_add_relu_kernel(y2_ref, x_ref, p2_ref, o_ref):
    fout = o_ref.shape[-1]
    p2 = p2_ref[...]
    scale = p2[0:1, :].reshape(1, 1, fout)
    shift = p2[1:2, :].reshape(1, 1, fout)
    out = jnp.maximum(y2_ref[...] * scale + shift + x_ref[...].astype(jnp.float32),
                      0.0)
    o_ref[...] = out.astype(o_ref.dtype)


def _fold_bn_scale_shift(stats, count, gamma, beta):
    """Reduce per-tile (sum, sumsq) -> packed (2, F) [scale; shift] for BN."""
    s = jnp.sum(stats[:, 0, :], axis=0)
    ss = jnp.sum(stats[:, 1, :], axis=0)
    mean = s / count
    var = jnp.maximum(ss / count - mean * mean, 0.0)    # biased var (training BN)
    scale = gamma * lax.rsqrt(var + EPS)
    shift = beta - mean * scale
    return jnp.stack([scale, shift], axis=0).astype(jnp.float32)


def _pack_weight(w_fck, cin_p, f_p):
    """PyTorch Conv1d weight (F, Cin, K) -> packed (Cin_p, K*F_p) tap matrix."""
    f, cin, k = w_fck.shape
    w = jnp.transpose(w_fck, (2, 1, 0))                               # (K, Cin, F)
    w = jnp.pad(w, ((0, 0), (0, cin_p - cin), (0, f_p - f)))
    return jnp.transpose(w, (1, 0, 2)).reshape(cin_p, k * f_p).astype(jnp.float32)


def basic_conv_res_block_nlc(x_nlc, params, *, tile_n=1,
                             compute_dtype=jnp.float32):
    """VDCNN BasicConvResBlock forward, channels-last (N, L, C) activations.

    params = (conv1.weight (F,C,K), conv1.bias (F,), bn1.weight (F,), bn1.bias (F,),
              conv2.weight (F,F,K), conv2.bias (F,), bn2.weight (F,), bn2.bias (F,))

    tile_n: sequences per grid step (N % tile_n == 0).  Bigger tiles amortize
      per-step overhead; smaller tiles expose more parallel grid steps (v7x
      megacore) and shrink the per-step VMEM footprint.
    compute_dtype: matmul operand dtype (jnp.bfloat16 on v6e/v7x doubles MXU
      rate; accumulation and BN statistics stay in float32 either way).
    """
    w1, _b1, g1, be1, w2, _b2, g2, be2 = params   # conv biases cancel under BN
    n, seq_len, c = x_nlc.shape
    f, _, k = w1.shape
    assert c == f, "shortcut residual add requires input_dim == n_filters"
    assert k % 2 == 1, "'same' conv expects odd kernel_size (padding=(K-1)//2)"
    assert n % tile_n == 0

    cp = -(-c // LANE) * LANE            # lane-align channels (== padded F too)
    dc = cp - c
    if dc:
        x_nlc = jnp.pad(x_nlc, ((0, 0), (0, 0), (0, dc)))
        g1, be1, g2, be2 = (jnp.pad(v, (0, dc)) for v in (g1, be1, g2, be2))
    w1p = _pack_weight(w1, cp, cp)
    w2p = _pack_weight(w2, cp, cp)

    n_tiles = n // tile_n
    grid = (n_tiles,)
    act_spec = pl.BlockSpec((tile_n, seq_len, cp), lambda i: (i, 0, 0))
    w_spec = pl.BlockSpec((cp, k * cp), lambda i: (0, 0))
    p_spec = pl.BlockSpec((2, cp), lambda i: (0, 0))
    st_spec = pl.BlockSpec((1, 2, cp), lambda i: (i, 0, 0))
    act_shape = jax.ShapeDtypeStruct((n, seq_len, cp), jnp.float32)
    st_shape = jax.ShapeDtypeStruct((n_tiles, 2, cp), jnp.float32)
    cparams = pltpu.CompilerParams(
        dimension_semantics=("parallel",),        # independent tiles: megacore-able
        vmem_limit_bytes=32 * 1024 * 1024)        # explicit; fits v5e/v6e/v7x

    count = float(n * seq_len)                    # BN statistics population

    # Pass 1: conv1 + per-tile (sum, sumsq) for BN1.
    y1, st1 = pl.pallas_call(
        functools.partial(_conv1_stats_kernel, compute_dtype=compute_dtype),
        grid=grid,
        in_specs=[act_spec, w_spec],
        out_specs=(act_spec, st_spec),
        out_shape=(act_shape, st_shape),
        compiler_params=cparams,
    )(x_nlc, w1p)
    p1 = _fold_bn_scale_shift(st1, count, g1, be1)

    # Pass 2: BN1 + ReLU + conv2 + per-tile (sum, sumsq) for BN2.
    y2, st2 = pl.pallas_call(
        functools.partial(_bn_relu_conv2_stats_kernel, compute_dtype=compute_dtype),
        grid=grid,
        in_specs=[act_spec, p_spec, w_spec],
        out_specs=(act_spec, st_spec),
        out_shape=(act_shape, st_shape),
        compiler_params=cparams,
    )(y1, p1, w2p)
    p2 = _fold_bn_scale_shift(st2, count, g2, be2)

    # Pass 3: BN2 + residual add + ReLU.
    out = pl.pallas_call(
        _bn_add_relu_kernel,
        grid=grid,
        in_specs=[act_spec, act_spec, p_spec],
        out_specs=act_spec,
        out_shape=jax.ShapeDtypeStruct((n, seq_len, cp), x_nlc.dtype),
        compiler_params=cparams,
    )(y2, x_nlc, p2)

    return out[:, :, :f] if dc else out


def basic_conv_res_block(x_ncl, params, *, tile_n=1, compute_dtype=jnp.float32):
    """PyTorch-layout (N, C, L) interface.  The two transposes below are the only
    layout glue; in a full VDCNN keep activations NLC and call the *_nlc entry."""
    out_nlf = basic_conv_res_block_nlc(jnp.transpose(x_ncl, (0, 2, 1)), params,
                                       tile_n=tile_n, compute_dtype=compute_dtype)
    return jnp.transpose(out_nlf, (0, 2, 1))


def reference(x_ncl, params):
    """Pure-JAX reference mirroring the PyTorch module (NCL layout, with biases)."""
    w1, b1, g1, be1, w2, b2, g2, be2 = params
    k = w1.shape[2]
    pad = (k - 1) // 2

    def conv(x, w, b):
        y = lax.conv_general_dilated(x, w, window_strides=(1,),
                                     padding=((pad, pad),),
                                     dimension_numbers=('NCH', 'OIH', 'NCH'))
        return y + b.reshape(1, -1, 1)

    def bn(y, g, be):
        mean = jnp.mean(y, axis=(0, 2), keepdims=True)
        var = jnp.mean((y - mean) ** 2, axis=(0, 2), keepdims=True)
        return ((y - mean) * lax.rsqrt(var + EPS) * g.reshape(1, -1, 1)
                + be.reshape(1, -1, 1))

    out = jnp.maximum(bn(conv(x_ncl, w1, b1), g1, be1), 0.0)
    out = bn(conv(out, w2, b2), g2, be2)
    return jnp.maximum(out + x_ncl, 0.0)


if __name__ == "__main__":
    # Small shapes consistent with the module (shortcut=True needs C == F);
    # channels chosen lane-aligned (128) so the MXU/VPU see full tiles.
    N, C, F, L, K = 4, 128, 128, 64, 3

    key = jax.random.PRNGKey(0)
    kx, kw1, kb1, kw2, kb2, kg1, kbe1, kg2, kbe2 = jax.random.split(key, 9)

    x_ncl = jax.random.normal(kx, (N, C, L), jnp.float32)
    w1 = jax.random.normal(kw1, (F, C, K), jnp.float32) * 0.1    # conv1.weight
    b1 = jax.random.normal(kb1, (F,), jnp.float32) * 0.1         # conv1.bias
    w2 = jax.random.normal(kw2, (F, F, K), jnp.float32) * 0.1    # conv2.weight
    b2 = jax.random.normal(kb2, (F,), jnp.float32) * 0.1         # conv2.bias
    g1 = 1.0 + 0.1 * jax.random.normal(kg1, (F,), jnp.float32)   # bn1.weight
    be1 = 0.1 * jax.random.normal(kbe1, (F,), jnp.float32)       # bn1.bias
    g2 = 1.0 + 0.1 * jax.random.normal(kg2, (F,), jnp.float32)   # bn2.weight
    be2 = 0.1 * jax.random.normal(kbe2, (F,), jnp.float32)       # bn2.bias
    params = (w1, b1, g1, be1, w2, b2, g2, be2)

    fwd = jax.jit(functools.partial(basic_conv_res_block, tile_n=2))
    out = jax.block_until_ready(fwd(x_ncl, params))

    ref = jax.block_until_ready(reference(x_ncl, params))
    assert out.shape == (N, F, L)
    assert jnp.allclose(out, ref, atol=1e-3, rtol=1e-3), (
        float(jnp.max(jnp.abs(out - ref))))

    print("KERNEL_OK")
</pallas_src>

<mosaic_0001>
module attributes {stable_mosaic.version = 11 : i64} {
  func.func @_conv1_stats_kernel(%arg0: i32, %arg1: memref<2x64x128xf32, #tpu.memory_space<vmem>>, %arg2: memref<128x384xf32, #tpu.memory_space<vmem>>, %arg3: memref<2x64x128xf32, #tpu.memory_space<vmem>>, %arg4: memref<1x2x128xf32, #tpu.memory_space<vmem>>) attributes {dimension_semantics = [#tpu.dimension_semantics<parallel>], iteration_bounds = array<i64: 2>, scalar_prefetch = 0 : i64, scratch_operands = 0 : i64, tpu.core_type = #tpu.core_type<tc>, window_params = [{transform_indices = @transform_0, window_bounds = array<i64: 2, 64, 128>}, {pipeline_mode = #tpu.pipeline_mode<synchronous>, transform_indices = @transform_1, window_bounds = array<i64: 128, 384>}, {transform_indices = @transform_2, window_bounds = array<i64: 2, 64, 128>}, {transform_indices = @transform_3, window_bounds = array<i64: 1, 2, 128>}]} {
    %c0 = arith.constant 0 : index
    %c0_0 = arith.constant 0 : index
    %c0_1 = arith.constant 0 : index
    %0 = vector.load %arg1[%c0, %c0_0, %c0_1] : memref<2x64x128xf32, #tpu.memory_space<vmem>>, vector<2x64x128xf32>
    %1 = vector.shape_cast %0 : vector<2x64x128xf32> to vector<128x128xf32>
    %2 = tpu.iota {dimensions = array<i32: 0>} : vector<64x1xi32>
    %3 = vector.shape_cast %2 : vector<64x1xi32> to vector<1x64x1xi32>
    %4 = vector.shape_cast %3 : vector<1x64x1xi32> to vector<1x64x1xi32>
    %5 = vector.broadcast %4 : vector<1x64x1xi32> to vector<2x64x1xi32>
    %6 = vector.shape_cast %5 : vector<2x64x1xi32> to vector<128x1xi32>
    %c0_2 = arith.constant 0 : index
    %c0_3 = arith.constant 0 : index
    %7 = vector.load %arg2[%c0_2, %c0_3] : memref<128x384xf32, #tpu.memory_space<vmem>>, vector<128x384xf32>
    %cst = arith.constant dense<0.000000e+00> : vector<128x384xf32>
    %8 = tpu.matmul %1, %7, %cst {dimension_numbers = #tpu.dot_dimension_numbers<[1], [0], [0], [1], [0, 0, 1, 1], [], []>} : vector<128x128xf32>, vector<128x384xf32>, vector<128x384xf32> -> vector<128x384xf32>
    %9 = vector.extract_strided_slice %8 {offsets = [0, 0], sizes = [128, 128], strides = [1, 1]} : vector<128x384xf32> to vector<128x128xf32>
    %c1_i32 = arith.constant 1 : i32
    %10 = tpu.dynamic_rotate %9 by %c1_i32 dim 0 : vector<128x128xf32>, i32 -> vector<128x128xf32>
    %c1_i32_4 = arith.constant 1 : i32
    %11 = vector.broadcast %c1_i32_4 : i32 to vector<128x1xi32>
    %12 = arith.cmpi slt, %6, %11 : vector<128x1xi32>
    %cst_5 = arith.constant 0.000000e+00 : f32
    %13 = vector.shape_cast %12 : vector<128x1xi1> to vector<128x1xi1>
    %14 = vector.broadcast %13 : vector<128x1xi1> to vector<128x128xi1>
    %15 = vector.broadcast %cst_5 : f32 to vector<128x128xf32>
    %16 = arith.select %14, %15, %10 : vector<128x128xi1>, vector<128x128xf32>
    %17 = vector.extract_strided_slice %8 {offsets = [0, 128], sizes = [128, 128], strides = [1, 1]} : vector<128x384xf32> to vector<128x128xf32>
    %18 = arith.addf %16, %17 : vector<128x128xf32>
    %19 = vector.extract_strided_slice %8 {offsets = [0, 256], sizes = [128, 128], strides = [1, 1]} : vector<128x384xf32> to vector<128x128xf32>
    %c127_i32 = arith.constant 127 : i32
    %20 = tpu.dynamic_rotate %19 by %c127_i32 dim 0 : vector<128x128xf32>, i32 -> vector<128x128xf32>
    %c63_i32 = arith.constant 63 : i32
    %21 = vector.broadcast %c63_i32 : i32 to vector<128x1xi32>
    %22 = arith.cmpi sge, %6, %21 : vector<128x1xi32>
    %cst_6 = arith.constant 0.000000e+00 : f32
    %23 = vector.shape_cast %22 : vector<128x1xi1> to vector<128x1xi1>
    %24 = vector.broadcast %23 : vector<128x1xi1> to vector<128x128xi1>
    %25 = vector.broadcast %cst_6 : f32 to vector<128x128xf32>
    %26 = arith.select %24, %25, %20 : vector<128x128xi1>, vector<128x128xf32>
    %27 = arith.addf %18, %26 : vector<128x128xf32>
    %28 = vector.shape_cast %27 : vector<128x128xf32> to vector<2x64x128xf32>
    %c0_7 = arith.constant 0 : index
    %c0_8 = arith.constant 0 : index
    %c0_9 = arith.constant 0 : index
    %29 = vector.load %arg3[%c0_7, %c0_8, %c0_9] : memref<2x64x128xf32, #tpu.memory_space<vmem>>, vector<2x64x128xf32>
    tpu.vector_store %arg3[%c0_7, %c0_8, %c0_9], %28 {strides = array<i32>} : memref<2x64x128xf32, #tpu.memory_space<vmem>>, vector<2x64x128xf32>,
    %cst_10 = arith.constant dense<0.000000e+00> : vector<128xf32>
    %30 = vector.multi_reduction <add>, %27, %cst_10 [0] : vector<128x128xf32> to vector<128xf32>
    %31 = vector.shape_cast %30 : vector<128xf32> to vector<1x128xf32>
    %32 = arith.mulf %27, %27 : vector<128x128xf32>
    %cst_11 = arith.constant dense<0.000000e+00> : vector<128xf32>
    %33 = vector.multi_reduction <add>, %32, %cst_11 [0] : vector<128x128xf32> to vector<128xf32>
    %34 = vector.shape_cast %33 : vector<128xf32> to vector<1x128xf32>
    %35 = tpu.concatenate %31, %34 in 0 : vector<1x128xf32>, vector<1x128xf32> -> vector<2x128xf32>
    %36 = vector.shape_cast %35 : vector<2x128xf32> to vector<1x2x128xf32>
    %c0_12 = arith.constant 0 : index
    %c0_13 = arith.constant 0 : index
    %c0_14 = arith.constant 0 : index
    %37 = vector.load %arg4[%c0_12, %c0_13, %c0_14] : memref<1x2x128xf32, #tpu.memory_space<vmem>>, vector<1x2x128xf32>
    tpu.vector_store %arg4[%c0_12, %c0_13, %c0_14], %36 {strides = array<i32>} : memref<1x2x128xf32, #tpu.memory_space<vmem>>, vector<1x2x128xf32>,
    return
  }
  func.func @transform_0(%arg0: i32) -> (i32, i32, i32) {
    %c0_i32 = arith.constant 0 : i32
    %c0_i32_0 = arith.constant 0 : i32
    %c0_i32_1 = arith.constant 0 : i32
    return %arg0, %c0_i32, %c0_i32_0 : i32, i32, i32
  }
  func.func @transform_1(%arg0: i32) -> (i32, i32) {
    %c0_i32 = arith.constant 0 : i32
    %c0_i32_0 = arith.constant 0 : i32
    %c0_i32_1 = arith.constant 0 : i32
    return %c0_i32, %c0_i32_0 : i32, i32
  }
  func.func @transform_2(%arg0: i32) -> (i32, i32, i32) {
    %c0_i32 = arith.constant 0 : i32
    %c0_i32_0 = arith.constant 0 : i32
    %c0_i32_1 = arith.constant 0 : i32
    return %arg0, %c0_i32, %c0_i32_0 : i32, i32, i32
  }
  func.func @transform_3(%arg0: i32) -> (i32, i32, i32) {
    %c0_i32 = arith.constant 0 : i32
    %c0_i32_0 = arith.constant 0 : i32
    %c0_i32_1 = arith.constant 0 : i32
    return %arg0, %c0_i32, %c0_i32_0 : i32, i32, i32
  }
}

module attributes {stable_mosaic.version = 11 : i64} {
  func.func @_bn_add_relu_kernel(%arg0: i32, %arg1: memref<2x64x128xf32, #tpu.memory_space<vmem>>, %arg2: memref<2x64x128xf32, #tpu.memory_space<vmem>>, %arg3: memref<2x128xf32, #tpu.memory_space<vmem>>, %arg4: memref<2x64x128xf32, #tpu.memory_space<vmem>>) attributes {dimension_semantics = [#tpu.dimension_semantics<parallel>], iteration_bounds = array<i64: 2>, scalar_prefetch = 0 : i64, scratch_operands = 0 : i64, tpu.core_type = #tpu.core_type<tc>, window_params = [{transform_indices = @transform_0, window_bounds = array<i64: 2, 64, 128>}, {transform_indices = @transform_1, window_bounds = array<i64: 2, 64, 128>}, {pipeline_mode = #tpu.pipeline_mode<synchronous>, transform_indices = @transform_2, window_bounds = array<i64: 2, 128>}, {transform_indices = @transform_3, window_bounds = array<i64: 2, 64, 128>}]} {
    %c0 = arith.constant 0 : index
    %c0_0 = arith.constant 0 : index
    %0 = vector.load %arg3[%c0, %c0_0] : memref<2x128xf32, #tpu.memory_space<vmem>>, vector<2x128xf32>
    %1 = vector.extract_strided_slice %0 {offsets = [0, 0], sizes = [1, 128], strides = [1, 1]} : vector<2x128xf32> to vector<1x128xf32>
    %2 = vector.shape_cast %1 : vector<1x128xf32> to vector<1x1x128xf32>
    %3 = vector.extract_strided_slice %0 {offsets = [1, 0], sizes = [1, 128], strides = [1, 1]} : vector<2x128xf32> to vector<1x128xf32>
    %4 = vector.shape_cast %3 : vector<1x128xf32> to vector<1x1x128xf32>
    %c0_1 = arith.constant 0 : index
    %c0_2 = arith.constant 0 : index
    %c0_3 = arith.constant 0 : index
    %5 = vector.load %arg1[%c0_1, %c0_2, %c0_3] : memref<2x64x128xf32, #tpu.memory_space<vmem>>, vector<2x64x128xf32>
    %6 = vector.broadcast %2 : vector<1x1x128xf32> to vector<2x64x128xf32>
    %7 = arith.mulf %5, %6 : vector<2x64x128xf32>
    %8 = vector.broadcast %4 : vector<1x1x128xf32> to vector<2x64x128xf32>
    %9 = arith.addf %7, %8 : vector<2x64x128xf32>
    %c0_4 = arith.constant 0 : index
    %c0_5 = arith.constant 0 : index
    %c0_6 = arith.constant 0 : index
    %10 = vector.load %arg2[%c0_4, %c0_5, %c0_6] : memref<2x64x128xf32, #tpu.memory_space<vmem>>, vector<2x64x128xf32>
    %11 = arith.addf %9, %10 : vector<2x64x128xf32>
    %cst = arith.constant 0.000000e+00 : f32
    %12 = vector.broadcast %cst : f32 to vector<2x64x128xf32>
    %13 = arith.maximumf %11, %12 : vector<2x64x128xf32>
    %c0_7 = arith.constant 0 : index
    %c0_8 = arith.constant 0 : index
    %c0_9 = arith.constant 0 : index
    %14 = vector.load %arg4[%c0_7, %c0_8, %c0_9] : memref<2x64x128xf32, #tpu.memory_space<vmem>>, vector<2x64x128xf32>
    tpu.vector_store %arg4[%c0_7, %c0_8, %c0_9], %13 {strides = array<i32>} : memref<2x64x128xf32, #tpu.memory_space<vmem>>, vector<2x64x128xf32>,
    return
  }
  func.func @transform_0(%arg0: i32) -> (i32, i32, i32) {
    %c0_i32 = arith.constant 0 : i32
    %c0_i32_0 = arith.constant 0 : i32
    %c0_i32_1 = arith.constant 0 : i32
    return %arg0, %c0_i32, %c0_i32_0 : i32, i32, i32
  }
  func.func @transform_1(%arg0: i32) -> (i32, i32, i32) {
    %c0_i32 = arith.constant 0 : i32
    %c0_i32_0 = arith.constant 0 : i32
    %c0_i32_1 = arith.constant 0 : i32
    return %arg0, %c0_i32, %c0_i32_0 : i32, i32, i32
  }
  func.func @transform_2(%arg0: i32) -> (i32, i32) {
    %c0_i32 = arith.constant 0 : i32
    %c0_i32_0 = arith.constant 0 : i32
    %c0_i32_1 = arith.constant 0 : i32
    return %c0_i32, %c0_i32_0 : i32, i32
  }
  func.func @transform_3(%arg0: i32) -> (i32, i32, i32) {
    %c0_i32 = arith.constant 0 : i32
    %c0_i32_0 = arith.constant 0 : i32
    %c0_i32_1 = arith.constant 0 : i32
    return %arg0, %c0_i32, %c0_i32_0 : i32, i32, i32
  }
}

module attributes {stable_mosaic.version = 11 : i64} {
  func.func @_bn_relu_conv2_stats_kernel(%arg0: i32, %arg1: memref<2x64x128xf32, #tpu.memory_space<vmem>>, %arg2: memref<2x128xf32, #tpu.memory_space<vmem>>, %arg3: memref<128x384xf32, #tpu.memory_space<vmem>>, %arg4: memref<2x64x128xf32, #tpu.memory_space<vmem>>, %arg5: memref<1x2x128xf32, #tpu.memory_space<vmem>>) attributes {dimension_semantics = [#tpu.dimension_semantics<parallel>], iteration_bounds = array<i64: 2>, scalar_prefetch = 0 : i64, scratch_operands = 0 : i64, tpu.core_type = #tpu.core_type<tc>, window_params = [{transform_indices = @transform_0, window_bounds = array<i64: 2, 64, 128>}, {pipeline_mode = #tpu.pipeline_mode<synchronous>, transform_indices = @transform_1, window_bounds = array<i64: 2, 128>}, {pipeline_mode = #tpu.pipeline_mode<synchronous>, transform_indices = @transform_2, window_bounds = array<i64: 128, 384>}, {transform_indices = @transform_3, window_bounds = array<i64: 2, 64, 128>}, {transform_indices = @transform_4, window_bounds = array<i64: 1, 2, 128>}]} {
    %c0 = arith.constant 0 : index
    %c0_0 = arith.constant 0 : index
    %0 = vector.load %arg2[%c0, %c0_0] : memref<2x128xf32, #tpu.memory_space<vmem>>, vector<2x128xf32>
    %c0_1 = arith.constant 0 : index
    %c0_2 = arith.constant 0 : index
    %c0_3 = arith.constant 0 : index
    %1 = vector.load %arg1[%c0_1, %c0_2, %c0_3] : memref<2x64x128xf32, #tpu.memory_space<vmem>>, vector<2x64x128xf32>
    %2 = vector.shape_cast %1 : vector<2x64x128xf32> to vector<128x128xf32>
    %3 = vector.extract_strided_slice %0 {offsets = [0, 0], sizes = [1, 128], strides = [1, 1]} : vector<2x128xf32> to vector<1x128xf32>
    %4 = vector.broadcast %3 : vector<1x128xf32> to vector<128x128xf32>
    %5 = arith.mulf %2, %4 : vector<128x128xf32>
    %6 = vector.extract_strided_slice %0 {offsets = [1, 0], sizes = [1, 128], strides = [1, 1]} : vector<2x128xf32> to vector<1x128xf32>
    %7 = vector.broadcast %6 : vector<1x128xf32> to vector<128x128xf32>
    %8 = arith.addf %5, %7 : vector<128x128xf32>
    %cst = arith.constant 0.000000e+00 : f32
    %9 = vector.broadcast %cst : f32 to vector<128x128xf32>
    %10 = arith.maximumf %8, %9 : vector<128x128xf32>
    %11 = tpu.iota {dimensions = array<i32: 0>} : vector<64x1xi32>
    %12 = vector.shape_cast %11 : vector<64x1xi32> to vector<1x64x1xi32>
    %13 = vector.shape_cast %12 : vector<1x64x1xi32> to vector<1x64x1xi32>
    %14 = vector.broadcast %13 : vector<1x64x1xi32> to vector<2x64x1xi32>
    %15 = vector.shape_cast %14 : vector<2x64x1xi32> to vector<128x1xi32>
    %c0_4 = arith.constant 0 : index
    %c0_5 = arith.constant 0 : index
    %16 = vector.load %arg3[%c0_4, %c0_5] : memref<128x384xf32, #tpu.memory_space<vmem>>, vector<128x384xf32>
    %cst_6 = arith.constant dense<0.000000e+00> : vector<128x384xf32>
    %17 = tpu.matmul %10, %16, %cst_6 {dimension_numbers = #tpu.dot_dimension_numbers<[1], [0], [0], [1], [0, 0, 1, 1], [], []>} : vector<128x128xf32>, vector<128x384xf32>, vector<128x384xf32> -> vector<128x384xf32>
    %18 = vector.extract_strided_slice %17 {offsets = [0, 0], sizes = [128, 128], strides = [1, 1]} : vector<128x384xf32> to vector<128x128xf32>
    %c1_i32 = arith.constant 1 : i32
    %19 = tpu.dynamic_rotate %18 by %c1_i32 dim 0 : vector<128x128xf32>, i32 -> vector<128x128xf32>
    %c1_i32_7 = arith.constant 1 : i32
    %20 = vector.broadcast %c1_i32_7 : i32 to vector<128x1xi32>
    %21 = arith.cmpi slt, %15, %20 : vector<128x1xi32>
    %cst_8 = arith.constant 0.000000e+00 : f32
    %22 = vector.shape_cast %21 : vector<128x1xi1> to vector<128x1xi1>
    %23 = vector.broadcast %22 : vector<128x1xi1> to vector<128x128xi1>
    %24 = vector.broadcast %cst_8 : f32 to vector<128x128xf32>
    %25 = arith.select %23, %24, %19 : vector<128x128xi1>, vector<128x128xf32>
    %26 = vector.extract_strided_slice %17 {offsets = [0, 128], sizes = [128, 128], strides = [1, 1]} : vector<128x384xf32> to vector<128x128xf32>
    %27 = arith.addf %25, %26 : vector<128x128xf32>
    %28 = vector.extract_strided_slice %17 {offsets = [0, 256], sizes = [128, 128], strides = [1, 1]} : vector<128x384xf32> to vector<128x128xf32>
    %c127_i32 = arith.constant 127 : i32
    %29 = tpu.dynamic_rotate %28 by %c127_i32 dim 0 : vector<128x128xf32>, i32 -> vector<128x128xf32>
    %c63_i32 = arith.constant 63 : i32
    %30 = vector.broadcast %c63_i32 : i32 to vector<128x1xi32>
    %31 = arith.cmpi sge, %15, %30 : vector<128x1xi32>
    %cst_9 = arith.constant 0.000000e+00 : f32
    %32 = vector.shape_cast %31 : vector<128x1xi1> to vector<128x1xi1>
    %33 = vector.broadcast %32 : vector<128x1xi1> to vector<128x128xi1>
    %34 = vector.broadcast %cst_9 : f32 to vector<128x128xf32>
    %35 = arith.select %33, %34, %29 : vector<128x128xi1>, vector<128x128xf32>
    %36 = arith.addf %27, %35 : vector<128x128xf32>
    %37 = vector.shape_cast %36 : vector<128x128xf32> to vector<2x64x128xf32>
    %c0_10 = arith.constant 0 : index
    %c0_11 = arith.constant 0 : index
    %c0_12 = arith.constant 0 : index
    %38 = vector.load %arg4[%c0_10, %c0_11, %c0_12] : memref<2x64x128xf32, #tpu.memory_space<vmem>>, vector<2x64x128xf32>
    tpu.vector_store %arg4[%c0_10, %c0_11, %c0_12], %37 {strides = array<i32>} : memref<2x64x128xf32, #tpu.memory_space<vmem>>, vector<2x64x128xf32>,
    %cst_13 = arith.constant dense<0.000000e+00> : vector<128xf32>
    %39 = vector.multi_reduction <add>, %36, %cst_13 [0] : vector<128x128xf32> to vector<128xf32>
    %40 = vector.shape_cast %39 : vector<128xf32> to vector<1x128xf32>
    %41 = arith.mulf %36, %36 : vector<128x128xf32>
    %cst_14 = arith.constant dense<0.000000e+00> : vector<128xf32>
    %42 = vector.multi_reduction <add>, %41, %cst_14 [0] : vector<128x128xf32> to vector<128xf32>
    %43 = vector.shape_cast %42 : vector<128xf32> to vector<1x128xf32>
    %44 = tpu.concatenate %40, %43 in 0 : vector<1x128xf32>, vector<1x128xf32> -> vector<2x128xf32>
    %45 = vector.shape_cast %44 : vector<2x128xf32> to vector<1x2x128xf32>
    %c0_15 = arith.constant 0 : index
    %c0_16 = arith.constant 0 : index
    %c0_17 = arith.constant 0 : index
    %46 = vector.load %arg5[%c0_15, %c0_16, %c0_17] : memref<1x2x128xf32, #tpu.memory_space<vmem>>, vector<1x2x128xf32>
    tpu.vector_store %arg5[%c0_15, %c0_16, %c0_17], %45 {strides = array<i32>} : memref<1x2x128xf32, #tpu.memory_space<vmem>>, vector<1x2x128xf32>,
    return
  }
  func.func @transform_0(%arg0: i32) -> (i32, i32, i32) {
    %c0_i32 = arith.constant 0 : i32
    %c0_i32_0 = arith.constant 0 : i32
    %c0_i32_1 = arith.constant 0 : i32
    return %arg0, %c0_i32, %c0_i32_0 : i32, i32, i32
  }
  func.func @transform_1(%arg0: i32) -> (i32, i32) {
    %c0_i32 = arith.constant 0 : i32
    %c0_i32_0 = arith.constant 0 : i32
    %c0_i32_1 = arith.constant 0 : i32
    return %c0_i32, %c0_i32_0 : i32, i32
  }
  func.func @transform_2(%arg0: i32) -> (i32, i32) {
    %c0_i32 = arith.constant 0 : i32
    %c0_i32_0 = arith.constant 0 : i32
    %c0_i32_1 = arith.constant 0 : i32
    return %c0_i32, %c0_i32_0 : i32, i32
  }
  func.func @transform_3(%arg0: i32) -> (i32, i32, i32) {
    %c0_i32 = arith.constant 0 : i32
    %c0_i32_0 = arith.constant 0 : i32
    %c0_i32_1 = arith.constant 0 : i32
    return %arg0, %c0_i32, %c0_i32_0 : i32, i32, i32
  }
  func.func @transform_4(%arg0: i32) -> (i32, i32, i32) {
    %c0_i32 = arith.constant 0 : i32
    %c0_i32_0 = arith.constant 0 : i32
    %c0_i32_1 = arith.constant 0 : i32
    return %arg0, %c0_i32, %c0_i32_0 : i32, i32, i32
  }
}

</mosaic_0001>

<llo_original>
// kernel: basic_conv_res_block.5
$region0: #{basic_conv_res_block.5}
  #allocation0 [shape = 'u32[]', space=smem, size = 0x4, offset = 0x4, fixed_abs, tag = 'smem constant byte address 0x4 - core index']
  #allocation1 [shape = 'u32[144,128]{1,0:T(1,128)}', space=vmem, size = 0x12000, scoped, tag = 'internal scratch']
  %s0 = inlined_call_operand.vmem [shape: f32[4,64,128], index: 0, kind: input, shape index: {}]
  %s1 = inlined_call_operand.vmem [shape: f32[4,64,128], index: 1, kind: input, shape index: {}]
  %s2 = inlined_call_operand.vmem [shape: f32[2,128], index: 2, kind: input, shape index: {}]
  %s3 = inlined_call_operand.hbm [shape: f32[4,64,128], index: 3, kind: output, shape index: {}]
  %s4 = sld [smem:[#allocation0]]
  $region45: #{basic_conv_res_block.5} parent=0
    _
  %s6 = ssub.s32 1, %s4
  %s7 = scalar_select 0, %s6, %s4
  $region1: #{basic_conv_res_block.5} parent=0
    #allocation2 [shape = 'u8[131072]{0}', space=vmem, size = 0x20000, scoped, tag = 'output window, operand 0']
    #allocation3 [shape = 's32[2]{0}', space=sflag, size = 0x8, scoped, tag = 'scoped memory for basic_conv_res_block.5']
    %8 = vsyncpa [#allocation3], 0
    %s9 = scalar_lea.sflag [#allocation3], 1
    %10 = vsyncpa %s9, 0
    loop: start=0, step=1, limit=4
    $region2: #{basic_conv_res_block.5} parent=1 // loop_pre_header
      _
    $region3: #{basic_conv_res_block.5} parent=1 // loop_header
      %s12 = sphi 0, %s16
      %p13 = scmp.ge.s32.totalorder %s12, 4
      %s22 = sphi 0, %s24
      %s25 = sphi 0, %s22
      %s26 = sphi 0, %s25
      %s42 = sphi 0, %s26
      %s48 = sphi 0, %s50
      %s51 = sphi 0, %s48
      %s52 = sphi 0, %s51
      %s68 = sphi 0, %s52
      %s72 = sphi 0, %s72
      %s74 = sphi 0, %s72
      %s75 = sphi 0, %s74
      %s89 = sphi 0, %s75
      %s95 = sphi 0, %s97
      %s98 = sphi 0, %s95
      %s99 = sphi 0, %s98
      %s115 = sphi 0, %s99
    $region4: #{basic_conv_res_block.5} parent=1 // loop_header_branch
      %15 = sbr.rel (%p13) target = $region8
    $region5: #{basic_conv_res_block.5} parent=1 // loop_body
      %s17 = ssub.s32 %s12, 1
      %s18 = ssub.s32 %s12, 2
      %s19 = sadd.s32 %s12, 1
      %s20 = ssub.s32 %s12, %s19
      %p21 = scmp.eq.s32.totalorder %s20, 0
      %s23 = sadd.s32 %s22, 1
      %s24 = scalar_select %p21, %s22, %s23
      %p27 = pneg %p21
      %p28 = scmp.eq.s32.totalorder %s12, 1
      %p29 = por %p27, %p28
      %p30 = scmp.ne.s32.totalorder %s22, %s25
      %p31 = scmp.eq.s32.totalorder %s12, 0
      %p32 = por %p30, %p31
      %p33 = scmp.ne.s32.totalorder %s22, %s25
      %p34 = scmp.eq.s32.totalorder %s17, 1
      %p35 = por %p33, %p34
      %p36 = scmp.ne.s32.totalorder %s25, %s26
      %p37 = scmp.eq.s32.totalorder %s17, 0
      %p38 = por %p36, %p37
      %p39 = scmp.ne.s32.totalorder %s25, %s26
      %p40 = scmp.eq.s32.totalorder %s18, 1
      %p41 = por %p39, %p40
      %p43 = scmp.ne.s32.totalorder %s26, %s42
      %p44 = scmp.eq.s32.totalorder %s18, 0
      %p45 = por %p43, %p44
      %s46 = ssub.s32 %s12, %s19
      %p47 = scmp.eq.s32.totalorder %s46, 0
      %s49 = sadd.s32 %s48, 1
      %s50 = scalar_select %p47, %s48, %s49
      %p53 = pneg %p47
      %p54 = scmp.eq.s32.totalorder %s12, 1
      %p55 = por %p53, %p54
      %p56 = scmp.ne.s32.totalorder %s48, %s51
      %p57 = scmp.eq.s32.totalorder %s12, 0
      %p58 = por %p56, %p57
      %p59 = scmp.ne.s32.totalorder %s48, %s51
      %p60 = scmp.eq.s32.totalorder %s17, 1
      %p61 = por %p59, %p60
      %p62 = scmp.ne.s32.totalorder %s51, %s52
      %p63 = scmp.eq.s32.totalorder %s17, 0
      %p64 = por %p62, %p63
      %p65 = scmp.ne.s32.totalorder %s51, %s52
      %p66 = scmp.eq.s32.totalorder %s18, 1
      %p67 = por %p65, %p66
      %p69 = scmp.ne.s32.totalorder %s52, %s68
      %p70 = scmp.eq.s32.totalorder %s18, 0
      %p71 = por %p69, %p70
      %s73 = sadd.s32 %s72, 1
      %p76 = scmp.eq.s32.totalorder %s12, 1
      %p77 = scmp.ne.s32.totalorder %s72, %s74
      %p78 = scmp.eq.s32.totalorder %s12, 0
      %p79 = por %p77, %p78
      %p80 = scmp.ne.s32.totalorder %s72, %s74
      %p81 = scmp.eq.s32.totalorder %s17, 1
      %p82 = por %p80, %p81
      %p83 = scmp.ne.s32.totalorder %s74, %s75
      %p84 = scmp.eq.s32.totalorder %s17, 0
      %p85 = por %p83, %p84
      %p86 = scmp.ne.s32.totalorder %s74, %s75
      %p87 = scmp.eq.s32.totalorder %s18, 1
      %p88 = por %p86, %p87
      %p90 = scmp.ne.s32.totalorder %s75, %s89
      %p91 = scmp.eq.s32.totalorder %s18, 0
      %p92 = por %p90, %p91
      %s93 = ssub.s32 %s12, %s19
      %p94 = scmp.eq.s32.totalorder %s93, 0
      %s96 = sadd.s32 %s95, 1
      %s97 = scalar_select %p94, %s95, %s96
      %p100 = pneg %p94
      %p101 = scmp.eq.s32.totalorder %s12, 1
      %p102 = por %p100, %p101
      %p103 = scmp.ne.s32.totalorder %s95, %s98
      %p104 = scmp.eq.s32.totalorder %s12, 0
      %p105 = por %p103, %p104
      %p106 = scmp.ne.s32.totalorder %s95, %s98
      %p107 = scmp.eq.s32.totalorder %s17, 1
      %p108 = por %p106, %p107
      %p109 = scmp.ne.s32.totalorder %s98, %s99
      %p110 = scmp.eq.s32.totalorder %s17, 0
      %p111 = por %p109, %p110
      %p112 = scmp.ne.s32.totalorder %s98, %s99
      %p113 = scmp.eq.s32.totalorder %s18, 1
      %p114 = por %p112, %p113
      %p116 = scmp.ne.s32.totalorder %s99, %s115
      %p117 = scmp.eq.s32.totalorder %s18, 0
      %p118 = por %p116, %p117
      %p119 = scmp.le.s32.totalorder 1, %s12
      %p120 = scmp.lt.s32.totalorder %s12, 3
      %p121 = pnand %p119, %p120
      %p122 = pneg %p121
      // Predicated region
      $region9: #{basic_conv_res_block.5} parent=5 // pred_check
        _
      $region10: #{basic_conv_res_block.5} parent=5 // pred_check_branch
        %124 = sbr.rel (%p121) target = $region12
      $region11: #{basic_conv_res_block.5} parent=5 // pred_region
        %s125 = ssub.s32 %s12, 1
        // Predicated region
        $region13: #{basic_conv_res_block.5} parent=11 // pred_check
          %p126 = pneg %p85
        $region14: #{basic_conv_res_block.5} parent=11 // pred_check_branch
          %128 = sbr.rel (%p126) target = $region16
        $region15: #{basic_conv_res_block.5} parent=11 // pred_region
          _
        $region16: #{basic_conv_res_block.5} parent=11 // pred_fallthru
          _
      $region12: #{basic_conv_res_block.5} parent=5 // pred_fallthru
        _
      %p129 = scmp.lt.s32.totalorder %s12, 2
      // Predicated region
      $region17: #{basic_conv_res_block.5} parent=5 // pred_check
        %p130 = pneg %p129
      $region18: #{basic_conv_res_block.5} parent=5 // pred_check_branch
        %132 = sbr.rel (%p130) target = $region20
      $region19: #{basic_conv_res_block.5} parent=5 // pred_region
        // Predicated region
        $region21: #{basic_conv_res_block.5} parent=19 // pred_check
          %p133 = pneg %p32
        $region22: #{basic_conv_res_block.5} parent=19 // pred_check_branch
          %135 = sbr.rel (%p133) target = $region24
        $region23: #{basic_conv_res_block.5} parent=19 // pred_region
          %s136 = smul.u32 2, %s12
          %p137 = scmp.lt.s32.totalorder %s136, 3
          %s138 = scalar_select %p137, %s136, 3
          %s139 = smul.addr %s138, 8
          %s140 = smul.addr %s139, 8
          %s141 = scalar_lea.vmem %s0, %s140
          %s142 = smul.u32 2, %s12
        $region24: #{basic_conv_res_block.5} parent=19 // pred_fallthru
          _
        // Predicated region
        $region25: #{basic_conv_res_block.5} parent=19 // pred_check
          %p143 = pneg %p58
        $region26: #{basic_conv_res_block.5} parent=19 // pred_check_branch
          %145 = sbr.rel (%p143) target = $region28
        $region27: #{basic_conv_res_block.5} parent=19 // pred_region
          %s146 = smul.u32 2, %s12
          %p147 = scmp.lt.s32.totalorder %s146, 3
          %s148 = scalar_select %p147, %s146, 3
          %s149 = smul.addr %s148, 8
          %s150 = smul.addr %s149, 8
          %s151 = scalar_lea.vmem %s1, %s150
          %s152 = smul.u32 2, %s12
        $region28: #{basic_conv_res_block.5} parent=19 // pred_fallthru
          _
      $region20: #{basic_conv_res_block.5} parent=5 // pred_fallthru
        _
      %p153 = scmp.le.s32.totalorder 1, %s12
      %p154 = scmp.lt.s32.totalorder %s12, 3
      %p155 = pnand %p153, %p154
      %p156 = pneg %p155
      // Predicated region
      $region29: #{basic_conv_res_block.5} parent=5 // pred_check
        _
      $region30: #{basic_conv_res_block.5} parent=5 // pred_check_branch
        %158 = sbr.rel (%p155) target = $region32
      $region31: #{basic_conv_res_block.5} parent=5 // pred_region
        %s159 = ssub.s32 %s12, 1
        %s160 = smul.u32 2, %s17
        %p161 = scmp.lt.s32.totalorder %s160, 3
        %s162 = scalar_select %p161, %s160, 3
        %s163 = smul.addr %s162, 8
        %s164 = smul.addr %s163, 8
        %s165 = scalar_lea.vmem %s0, %s164
        %p166 = pneg %p38
        %p167 = pneg %p35
        %s168 = smul.u32 2, %s17
        %p169 = scmp.lt.s32.totalorder %s168, 3
        %s170 = scalar_select %p169, %s168, 3
        %s171 = smul.addr %s170, 8
        %s172 = smul.addr %s171, 8
        %s173 = scalar_lea.vmem %s1, %s172
        %p174 = pneg %p64
        %p175 = pneg %p61
        %p176 = pneg %p85
        %p177 = pneg %p82
        %p178 = pneg %p111
        %p179 = pneg %p108
        %s180 = sand.u32 %s98, 1
        %s181 = scalar_lea.sflag [#allocation3], %s180
        %s182 = sand.u32 %s98, 1
        %s183 = smul.addr %s182, 128
        %s184 = scalar_lea.vmem [#allocation2], %s183
        %s185 = smul.u32 2, %s17
        %p186 = scmp.lt.s32.totalorder %s185, 3
        %s187 = scalar_select %p186, %s185, 3
        %s188 = smul.addr %s187, 8
        %s189 = smul.addr %s188, 8
        %s190 = scalar_lea.vmem %s0, %s189
        %s191 = smul.u32 2, %s17
        %s192 = smul.u32 2, %s17
        %p193 = scmp.lt.s32.totalorder %s192, 3
        %s194 = scalar_select %p193, %s192, 3
        %s195 = smul.addr %s194, 8
        %s196 = smul.addr %s195, 8
        %s197 = scalar_lea.vmem %s1, %s196
        %s198 = smul.u32 2, %s17
        %s199 = smul.u32 2, %s17
        %v200 = vld [vmem:[%s2] sm:$0x3]
        %v201 = vld [vmem:[%s190] sm:$0xff]
        %v202 = vld [vmem:[%s190 + $0x8] sm:$0xff]
        %v203 = vld [vmem:[%s190 + $0x10] sm:$0xff]
        %v204 = vld [vmem:[%s190 + $0x18] sm:$0xff]
        %v205 = vld [vmem:[%s190 + $0x20] sm:$0xff]
        %v206 = vld [vmem:[%s190 + $0x28] sm:$0xff]
        %v207 = vld [vmem:[%s190 + $0x30] sm:$0xff]
        %v208 = vld [vmem:[%s190 + $0x38] sm:$0xff]
        %v209 = vld [vmem:[%s190 + $0x40] sm:$0xff]
        %v210 = vld [vmem:[%s190 + $0x48] sm:$0xff]
        %v211 = vld [vmem:[%s190 + $0x50] sm:$0xff]
        %v212 = vld [vmem:[%s190 + $0x58] sm:$0xff]
        %v213 = vld [vmem:[%s190 + $0x60] sm:$0xff]
        %v214 = vld [vmem:[%s190 + $0x68] sm:$0xff]
        %v215 = vld [vmem:[%s190 + $0x70] sm:$0xff]
        %v216 = vld [vmem:[%s190 + $0x78] sm:$0xff]
        %v217 = vlaneseq
        %v218 = vshrl.u32 %v217, 7
        %v219 = vsub.s32 0, %v218
        %v220 = vrot.slane %v200, %v219
        %v221 = vmul.f32 %v201, %v220
        %v222 = vmul.f32 %v202, %v220
        %v223 = vmul.f32 %v203, %v220
        %v224 = vmul.f32 %v204, %v220
        %v225 = vmul.f32 %v205, %v220
        %v226 = vmul.f32 %v206, %v220
        %v227 = vmul.f32 %v207, %v220
        %v228 = vmul.f32 %v208, %v220
        %v229 = vmul.f32 %v209, %v220
        %v230 = vmul.f32 %v210, %v220
        %v231 = vmul.f32 %v211, %v220
        %v232 = vmul.f32 %v212, %v220
        %v233 = vmul.f32 %v213, %v220
        %v234 = vmul.f32 %v214, %v220
        %v235 = vmul.f32 %v215, %v220
        %v236 = vmul.f32 %v216, %v220
        %v237 = vlaneseq
        %v238 = vshrl.u32 %v237, 7
        %v239 = vsub.s32 1, %v238
        %v240 = vrot.slane %v200, %v239
        %v241 = vadd.f32 %v221, %v240
        %v242 = vadd.f32 %v222, %v240
        %v243 = vadd.f32 %v223, %v240
        %v244 = vadd.f32 %v224, %v240
        %v245 = vadd.f32 %v225, %v240
        %v246 = vadd.f32 %v226, %v240
        %v247 = vadd.f32 %v227, %v240
        %v248 = vadd.f32 %v228, %v240
        %v249 = vadd.f32 %v229, %v240
        %v250 = vadd.f32 %v230, %v240
        %v251 = vadd.f32 %v231, %v240
        %v252 = vadd.f32 %v232, %v240
        %v253 = vadd.f32 %v233, %v240
        %v254 = vadd.f32 %v234, %v240
        %v255 = vadd.f32 %v235, %v240
        %v256 = vadd.f32 %v236, %v240
        %v257 = vld [vmem:[%s197] sm:$0xff]
        %v258 = vld [vmem:[%s197 + $0x8] sm:$0xff]
        %v259 = vld [vmem:[%s197 + $0x10] sm:$0xff]
        %v260 = vld [vmem:[%s197 + $0x18] sm:$0xff]
        %v261 = vld [vmem:[%s197 + $0x20] sm:$0xff]
        %v262 = vld [vmem:[%s197 + $0x28] sm:$0xff]
        %v263 = vld [vmem:[%s197 + $0x30] sm:$0xff]
        %v264 = vld [vmem:[%s197 + $0x38] sm:$0xff]
        %v265 = vld [vmem:[%s197 + $0x40] sm:$0xff]
        %v266 = vld [vmem:[%s197 + $0x48] sm:$0xff]
        %v267 = vld [vmem:[%s197 + $0x50] sm:$0xff]
        %v268 = vld [vmem:[%s197 + $0x58] sm:$0xff]
        %v269 = vld [vmem:[%s197 + $0x60] sm:$0xff]
        %v270 = vld [vmem:[%s197 + $0x68] sm:$0xff]
        %v271 = vld [vmem:[%s197 + $0x70] sm:$0xff]
        %v272 = vld [vmem:[%s197 + $0x78] sm:$0xff]
        %v273 = vadd.f32 %v241, %v257
        %v274 = vadd.f32 %v242, %v258
        %v275 = vadd.f32 %v243, %v259
        %v276 = vadd.f32 %v244, %v260
        %v277 = vadd.f32 %v245, %v261
        %v278 = vadd.f32 %v246, %v262
        %v279 = vadd.f32 %v247, %v263
        %v280 = vadd.f32 %v248, %v264
        %v281 = vadd.f32 %v249, %v265
        %v282 = vadd.f32 %v250, %v266
        %v283 = vadd.f32 %v251, %v267
        %v284 = vadd.f32 %v252, %v268
        %v285 = vadd.f32 %v253, %v269
        %v286 = vadd.f32 %v254, %v270
        %v287 = vadd.f32 %v255, %v271
        %v288 = vadd.f32 %v256, %v272
        %v289 = vmax.f32 %v273, 0.0
        %v290 = vmax.f32 %v274, 0.0
        %v291 = vmax.f32 %v275, 0.0
        %v292 = vmax.f32 %v276, 0.0
        %v293 = vmax.f32 %v277, 0.0
        %v294 = vmax.f32 %v278, 0.0
        %v295 = vmax.f32 %v279, 0.0
        %v296 = vmax.f32 %v280, 0.0
        %v297 = vmax.f32 %v281, 0.0
        %v298 = vmax.f32 %v282, 0.0
        %v299 = vmax.f32 %v283, 0.0
        %v300 = vmax.f32 %v284, 0.0
        %v301 = vmax.f32 %v285, 0.0
        %v302 = vmax.f32 %v286, 0.0
        %v303 = vmax.f32 %v287, 0.0
        %v304 = vmax.f32 %v288, 0.0
        %305 = vst [vmem:[%s184] sm:$0xff] %v289
        %306 = vst [vmem:[%s184 + $0x8] sm:$0xff] %v290
        %307 = vst [vmem:[%s184 + $0x10] sm:$0xff] %v291
        %308 = vst [vmem:[%s184 + $0x18] sm:$0xff] %v292
        %309 = vst [vmem:[%s184 + $0x20] sm:$0xff] %v293
        %310 = vst [vmem:[%s184 + $0x28] sm:$0xff] %v294
        %311 = vst [vmem:[%s184 + $0x30] sm:$0xff] %v295
        %312 = vst [vmem:[%s184 + $0x38] sm:$0xff] %v296
        %313 = vst [vmem:[%s184 + $0x40] sm:$0xff] %v297
        %314 = vst [vmem:[%s184 + $0x48] sm:$0xff] %v298
        %315 = vst [vmem:[%s184 + $0x50] sm:$0xff] %v299
        %316 = vst [vmem:[%s184 + $0x58] sm:$0xff] %v300
        %317 = vst [vmem:[%s184 + $0x60] sm:$0xff] %v301
        %318 = vst [vmem:[%s184 + $0x68] sm:$0xff] %v302
        %319 = vst [vmem:[%s184 + $0x70] sm:$0xff] %v303
        %320 = vst [vmem:[%s184 + $0x78] sm:$0xff] %v304
        %s321 = sand.u32 %s98, 1
        %s322 = scalar_lea.sflag [#allocation3], %s321
        %s323 = sand.u32 %s98, 1
        %s324 = smul.addr %s323, 128
        %s325 = scalar_lea.vmem [#allocation2], %s324
        // Predicated region
        $region33: #{basic_conv_res_block.5} parent=31 // pred_check
          %p326 = pneg %p108
        $region34: #{basic_conv_res_block.5} parent=31 // pred_check_branch
          %328 = sbr.rel (%p326) target = $region36
        $region35: #{basic_conv_res_block.5} parent=31 // pred_region
          %s329 = smul.u32 2, %s17
          %s331 = ssub.s32 2048, 2048
          %332 = vsyncadd %s322, %s331
          %s333 = smul.addr %s329, 8
          %s334 = smul.addr %s333, 128
          %s335 = scalar_lea.hbm %s3, %s334
          %s336 = sshll.u32 %s325, 4
          %s337 = int_to_ptr.vmem [resolvable:$true] %s336
          %342 = dma.vmem_to_hbm [thread:$0]  %s337, 2048, %s335, %s322, 128, 128, 8
        $region36: #{basic_conv_res_block.5} parent=31 // pred_fallthru
          _
      $region32: #{basic_conv_res_block.5} parent=5 // pred_fallthru
        _
      %p343 = scmp.le.s32.totalorder 2, %s12
      // Predicated region
      $region37: #{basic_conv_res_block.5} parent=5 // pred_check
        %p344 = pneg %p343
      $region38: #{basic_conv_res_block.5} parent=5 // pred_check_branch
        %346 = sbr.rel (%p344) target = $region40
      $region39: #{basic_conv_res_block.5} parent=5 // pred_region
        %s347 = ssub.s32 %s12, 2
        // Predicated region
        $region41: #{basic_conv_res_block.5} parent=39 // pred_check
          %p348 = pneg %p114
        $region42: #{basic_conv_res_block.5} parent=39 // pred_check_branch
          %350 = sbr.rel (%p348) target = $region44
        $region43: #{basic_conv_res_block.5} parent=39 // pred_region
          %s351 = sand.u32 %s99, 1
          %s352 = scalar_lea.sflag [#allocation3], %s351
          %s353 = sand.u32 %s99, 1
          %s354 = smul.addr %s353, 128
          %s355 = scalar_lea.vmem [#allocation2], %s354
          %356 = dma.done %s352, 2048
        $region44: #{basic_conv_res_block.5} parent=39 // pred_fallthru
          _
      $region40: #{basic_conv_res_block.5} parent=5 // pred_fallthru
        _
    $region6: #{basic_conv_res_block.5} parent=1 // loop_footer
      %s16 = sadd.s32 1, %s12
    $region7: #{basic_conv_res_block.5} parent=1 // loop_footer_branch
      %11 = sbr.rel target = $region3
    $region8: #{basic_conv_res_block.5} parent=1 // loop_exit
      _
    %357 = vsyncpa [#allocation3], 1
    %s358 = scalar_lea.sflag [#allocation3], 1
    %359 = vsyncpa %s358, 1

// kernel: basic_conv_res_block.3
$region0: #{basic_conv_res_block.3}
  #allocation0 [shape = 'u32[]', space=smem, size = 0x4, offset = 0x4, fixed_abs, tag = 'smem constant byte address 0x4 - core index']
  #allocation1 [shape = 'u32[144,128]{1,0:T(1,128)}', space=vmem, size = 0x12000, scoped, tag = 'internal scratch']
  %s0 = inlined_call_operand.vmem [shape: f32[4,64,128], index: 0, kind: input, shape index: {}]
  %s1 = inlined_call_operand.vmem [shape: f32[128,384], index: 1, kind: input, shape index: {}]
  %s2 = inlined_call_operand.vmem [shape: f32[4,64,128], index: 2, kind: output, shape index: {0}]
  %s3 = inlined_call_operand.vmem [shape: f32[2,2,128], index: 3, kind: output, shape index: {1}]
  %4 = xla_tuple %s2, %s3
  %s5 = sld [smem:[#allocation0]]
  $region49: #{basic_conv_res_block.3} parent=0
    _
  %s7 = ssub.s32 1, %s5
  %s8 = scalar_select 0, %s7, %s5
  loop: start=0, step=1, limit=4
  $region2: #{basic_conv_res_block.3} parent=0 // loop_pre_header
    _
  $region3: #{basic_conv_res_block.3} parent=0 // loop_header
    %s10 = sphi 0, %s14
    %p11 = scmp.ge.s32.totalorder %s10, 4
    %s20 = sphi 0, %s22
    %s23 = sphi 0, %s20
    %s24 = sphi 0, %s23
    %s40 = sphi 0, %s24
    %s44 = sphi 0, %s44
    %s46 = sphi 0, %s44
    %s47 = sphi 0, %s46
    %s61 = sphi 0, %s47
    %s67 = sphi 0, %s69
    %s70 = sphi 0, %s67
    %s71 = sphi 0, %s70
    %s87 = sphi 0, %s71
    %s93 = sphi 0, %s95
    %s96 = sphi 0, %s93
    %s97 = sphi 0, %s96
    %s113 = sphi 0, %s97
  $region4: #{basic_conv_res_block.3} parent=0 // loop_header_branch
    %13 = sbr.rel (%p11) target = $region8
  $region5: #{basic_conv_res_block.3} parent=0 // loop_body
    %s15 = ssub.s32 %s10, 1
    %s16 = ssub.s32 %s10, 2
    %s17 = sadd.s32 %s10, 1
    %s18 = ssub.s32 %s10, %s17
    %p19 = scmp.eq.s32.totalorder %s18, 0
    %s21 = sadd.s32 %s20, 1
    %s22 = scalar_select %p19, %s20, %s21
    %p25 = pneg %p19
    %p26 = scmp.eq.s32.totalorder %s10, 1
    %p27 = por %p25, %p26
    %p28 = scmp.ne.s32.totalorder %s20, %s23
    %p29 = scmp.eq.s32.totalorder %s10, 0
    %p30 = por %p28, %p29
    %p31 = scmp.ne.s32.totalorder %s20, %s23
    %p32 = scmp.eq.s32.totalorder %s15, 1
    %p33 = por %p31, %p32
    %p34 = scmp.ne.s32.totalorder %s23, %s24
    %p35 = scmp.eq.s32.totalorder %s15, 0
    %p36 = por %p34, %p35
    %p37 = scmp.ne.s32.totalorder %s23, %s24
    %p38 = scmp.eq.s32.totalorder %s16, 1
    %p39 = por %p37, %p38
    %p41 = scmp.ne.s32.totalorder %s24, %s40
    %p42 = scmp.eq.s32.totalorder %s16, 0
    %p43 = por %p41, %p42
    %s45 = sadd.s32 %s44, 1
    %p48 = scmp.eq.s32.totalorder %s10, 1
    %p49 = scmp.ne.s32.totalorder %s44, %s46
    %p50 = scmp.eq.s32.totalorder %s10, 0
    %p51 = por %p49, %p50
    %p52 = scmp.ne.s32.totalorder %s44, %s46
    %p53 = scmp.eq.s32.totalorder %s15, 1
    %p54 = por %p52, %p53
    %p55 = scmp.ne.s32.totalorder %s46, %s47
    %p56 = scmp.eq.s32.totalorder %s15, 0
    %p57 = por %p55, %p56
    %p58 = scmp.ne.s32.totalorder %s46, %s47
    %p59 = scmp.eq.s32.totalorder %s16, 1
    %p60 = por %p58, %p59
    %p62 = scmp.ne.s32.totalorder %s47, %s61
    %p63 = scmp.eq.s32.totalorder %s16, 0
    %p64 = por %p62, %p63
    %s65 = ssub.s32 %s10, %s17
    %p66 = scmp.eq.s32.totalorder %s65, 0
    %s68 = sadd.s32 %s67, 1
    %s69 = scalar_select %p66, %s67, %s68
    %p72 = pneg %p66
    %p73 = scmp.eq.s32.totalorder %s10, 1
    %p74 = por %p72, %p73
    %p75 = scmp.ne.s32.totalorder %s67, %s70
    %p76 = scmp.eq.s32.totalorder %s10, 0
    %p77 = por %p75, %p76
    %p78 = scmp.ne.s32.totalorder %s67, %s70
    %p79 = scmp.eq.s32.totalorder %s15, 1
    %p80 = por %p78, %p79
    %p81 = scmp.ne.s32.totalorder %s70, %s71
    %p82 = scmp.eq.s32.totalorder %s15, 0
    %p83 = por %p81, %p82
    %p84 = scmp.ne.s32.totalorder %s70, %s71
    %p85 = scmp.eq.s32.totalorder %s16, 1
    %p86 = por %p84, %p85
    %p88 = scmp.ne.s32.totalorder %s71, %s87
    %p89 = scmp.eq.s32.totalorder %s16, 0
    %p90 = por %p88, %p89
    %s91 = ssub.s32 %s10, %s17
    %p92 = scmp.eq.s32.totalorder %s91, 0
    %s94 = sadd.s32 %s93, 1
    %s95 = scalar_select %p92, %s93, %s94
    %p98 = pneg %p92
    %p99 = scmp.eq.s32.totalorder %s10, 1
    %p100 = por %p98, %p99
    %p101 = scmp.ne.s32.totalorder %s93, %s96
    %p102 = scmp.eq.s32.totalorder %s10, 0
    %p103 = por %p101, %p102
    %p104 = scmp.ne.s32.totalorder %s93, %s96
    %p105 = scmp.eq.s32.totalorder %s15, 1
    %p106 = por %p104, %p105
    %p107 = scmp.ne.s32.totalorder %s96, %s97
    %p108 = scmp.eq.s32.totalorder %s15, 0
    %p109 = por %p107, %p108
    %p110 = scmp.ne.s32.totalorder %s96, %s97
    %p111 = scmp.eq.s32.totalorder %s16, 1
    %p112 = por %p110, %p111
    %p114 = scmp.ne.s32.totalorder %s97, %s113
    %p115 = scmp.eq.s32.totalorder %s16, 0
    %p116 = por %p114, %p115
    %p117 = scmp.le.s32.totalorder 1, %s10
    %p118 = scmp.lt.s32.totalorder %s10, 3
    %p119 = pnand %p117, %p118
    %p120 = pneg %p119
    // Predicated region
    $region9: #{basic_conv_res_block.3} parent=5 // pred_check
      _
    $region10: #{basic_conv_res_block.3} parent=5 // pred_check_branch
      %122 = sbr.rel (%p119) target = $region12
    $region11: #{basic_conv_res_block.3} parent=5 // pred_region
      %s123 = ssub.s32 %s10, 1
      // Predicated region
      $region13: #{basic_conv_res_block.3} parent=11 // pred_check
        %p124 = pneg %p57
      $region14: #{basic_conv_res_block.3} parent=11 // pred_check_branch
        %126 = sbr.rel (%p124) target = $region16
      $region15: #{basic_conv_res_block.3} parent=11 // pred_region
        _
      $region16: #{basic_conv_res_block.3} parent=11 // pred_fallthru
        _
    $region12: #{basic_conv_res_block.3} parent=5 // pred_fallthru
      _
    %p127 = scmp.lt.s32.totalorder %s10, 2
    // Predicated region
    $region17: #{basic_conv_res_block.3} parent=5 // pred_check
      %p128 = pneg %p127
    $region18: #{basic_conv_res_block.3} parent=5 // pred_check_branch
      %130 = sbr.rel (%p128) target = $region20
    $region19: #{basic_conv_res_block.3} parent=5 // pred_region
      // Predicated region
      $region21: #{basic_conv_res_block.3} parent=19 // pred_check
        %p131 = pneg %p30
      $region22: #{basic_conv_res_block.3} parent=19 // pred_check_branch
        %133 = sbr.rel (%p131) target = $region24
      $region23: #{basic_conv_res_block.3} parent=19 // pred_region
        %s134 = smul.u32 2, %s10
        %p135 = scmp.lt.s32.totalorder %s134, 3
        %s136 = scalar_select %p135, %s134, 3
        %s137 = smul.addr %s136, 8
        %s138 = smul.addr %s137, 8
        %s139 = scalar_lea.vmem %s0, %s138
        %s140 = smul.u32 2, %s10
      $region24: #{basic_conv_res_block.3} parent=19 // pred_fallthru
        _
    $region20: #{basic_conv_res_block.3} parent=5 // pred_fallthru
      _
    %p141 = scmp.le.s32.totalorder 1, %s10
    %p142 = scmp.lt.s32.totalorder %s10, 3
    %p143 = pnand %p141, %p142
    %p144 = pneg %p143
    // Predicated region
    $region25: #{basic_conv_res_block.3} parent=5 // pred_check
      _
    $region26: #{basic_conv_res_block.3} parent=5 // pred_check_branch
      %146 = sbr.rel (%p143) target = $region28
    $region27: #{basic_conv_res_block.3} parent=5 // pred_region
      %s147 = ssub.s32 %s10, 1
      %s148 = smul.u32 2, %s15
      %p149 = scmp.lt.s32.totalorder %s148, 3
      %s150 = scalar_select %p149, %s148, 3
      %s151 = smul.addr %s150, 8
      %s152 = smul.addr %s151, 8
      %s153 = scalar_lea.vmem %s0, %s152
      %p154 = pneg %p36
      %p155 = pneg %p33
      %p156 = pneg %p57
      %p157 = pneg %p54
      %p158 = pneg %p83
      %p159 = pneg %p80
      %s160 = smul.u32 2, %s15
      %p161 = scmp.lt.s32.totalorder %s160, 3
      %s162 = scalar_select %p161, %s160, 3
      %s163 = smul.addr %s162, 8
      %s164 = smul.addr %s163, 8
      %s165 = scalar_lea.vmem %s2, %s164
      %p166 = pneg %p109
      %p167 = pneg %p106
      %p168 = scmp.lt.s32.totalorder %s15, 1
      %s169 = scalar_select %p168, %s15, 1
      %s170 = smul.addr %s169, 2
      %s171 = scalar_lea.vmem %s3, %s170
      %s172 = smul.u32 2, %s15
      %p173 = scmp.lt.s32.totalorder %s172, 3
      %s174 = scalar_select %p173, %s172, 3
      %s175 = smul.addr %s174, 8
      %s176 = smul.addr %s175, 8
      %s177 = scalar_lea.vmem %s0, %s176
      %s178 = smul.u32 2, %s15
      %s179 = smul.u32 2, %s15
      %p180 = scmp.lt.s32.totalorder %s179, 3
      %s181 = scalar_select %p180, %s179, 3
      %s182 = smul.addr %s181, 8
      %s183 = smul.addr %s182, 8
      %s184 = scalar_lea.vmem %s2, %s183
      %s185 = smul.u32 2, %s15
      %p186 = scmp.lt.s32.totalorder %s15, 1
      %s187 = scalar_select %p186, %s15, 1
      %s188 = smul.addr %s187, 2
      %s189 = scalar_lea.vmem %s3, %s188
      %v190 = vld [vmem:[%s177] sm:$0xff]
      %v191 = vld [vmem:[%s177 + $0x8] sm:$0xff]
      %v192 = vld [vmem:[%s177 + $0x10] sm:$0xff]
      %v193 = vld [vmem:[%s177 + $0x18] sm:$0xff]
      %v194 = vld [vmem:[%s177 + $0x20] sm:$0xff]
      %v195 = vld [vmem:[%s177 + $0x28] sm:$0xff]
      %v196 = vld [vmem:[%s177 + $0x30] sm:$0xff]
      %v197 = vld [vmem:[%s177 + $0x38] sm:$0xff]
      %v198 = vld [vmem:[%s177 + $0x40] sm:$0xff]
      %v199 = vld [vmem:[%s177 + $0x48] sm:$0xff]
      %v200 = vld [vmem:[%s177 + $0x50] sm:$0xff]
      %v201 = vld [vmem:[%s177 + $0x58] sm:$0xff]
      %v202 = vld [vmem:[%s177 + $0x60] sm:$0xff]
      %v203 = vld [vmem:[%s177 + $0x68] sm:$0xff]
      %v204 = vld [vmem:[%s177 + $0x70] sm:$0xff]
      %v205 = vld [vmem:[%s177 + $0x78] sm:$0xff]
      %v206 = vlaneseq
      %v207 = vshrl.u32 %v206, 7
      %v208 = vadd.s32 %v207, 8
      %v209 = vadd.s32 %v207, 16
      %v210 = vadd.s32 %v207, 24
      %v211 = vadd.s32 %v207, 32
      %v212 = vadd.s32 %v207, 40
      %v213 = vadd.s32 %v207, 48
      %v214 = vadd.s32 %v207, 56
      %v215 = vld [vmem:[%s1] sm:$0xff]
      %v216 = vld [vmem:[%s1 + $0x8] sm:$0xff]
      %v217 = vld [vmem:[%s1 + $0x10] sm:$0xff]
      %v218 = vld [vmem:[%s1 + $0x18] sm:$0xff]
      %v219 = vld [vmem:[%s1 + $0x20] sm:$0xff]
      %v220 = vld [vmem:[%s1 + $0x28] sm:$0xff]
      %v221 = vld [vmem:[%s1 + $0x30] sm:$0xff]
      %v222 = vld [vmem:[%s1 + $0x38] sm:$0xff]
      %v223 = vld [vmem:[%s1 + $0x40] sm:$0xff]
      %v224 = vld [vmem:[%s1 + $0x48] sm:$0xff]
      %v225 = vld [vmem:[%s1 + $0x50] sm:$0xff]
      %v226 = vld [vmem:[%s1 + $0x58] sm:$0xff]
      %v227 = vld [vmem:[%s1 + $0x60] sm:$0xff]
      %v228 = vld [vmem:[%s1 + $0x68] sm:$0xff]
      %v229 = vld [vmem:[%s1 + $0x70] sm:$0xff]
      %v230 = vld [vmem:[%s1 + $0x78] sm:$0xff]
      %v231 = vld [vmem:[%s1 + $0x80] sm:$0xff]
      %v232 = vld [vmem:[%s1 + $0x88] sm:$0xff]
      %v233 = vld [vmem:[%s1 + $0x90] sm:$0xff]
      %v234 = vld [vmem:[%s1 + $0x98] sm:$0xff]
      %v235 = vld [vmem:[%s1 + $0xa0] sm:$0xff]
      %v236 = vld [vmem:[%s1 + $0xa8] sm:$0xff]
      %v237 = vld [vmem:[%s1 + $0xb0] sm:$0xff]
      %v238 = vld [vmem:[%s1 + $0xb8] sm:$0xff]
      %v239 = vld [vmem:[%s1 + $0xc0] sm:$0xff]
      %v240 = vld [vmem:[%s1 + $0xc8] sm:$0xff]
      %v241 = vld [vmem:[%s1 + $0xd0] sm:$0xff]
      %v242 = vld [vmem:[%s1 + $0xd8] sm:$0xff]
      %v243 = vld [vmem:[%s1 + $0xe0] sm:$0xff]
      %v244 = vld [vmem:[%s1 + $0xe8] sm:$0xff]
      %v245 = vld [vmem:[%s1 + $0xf0] sm:$0xff]
      %v246 = vld [vmem:[%s1 + $0xf8] sm:$0xff]
      %v247 = vld [vmem:[%s1 + $0x100] sm:$0xff]
      %v248 = vld [vmem:[%s1 + $0x108] sm:$0xff]
      %v249 = vld [vmem:[%s1 + $0x110] sm:$0xff]
      %v250 = vld [vmem:[%s1 + $0x118] sm:$0xff]
      %v251 = vld [vmem:[%s1 + $0x120] sm:$0xff]
      %v252 = vld [vmem:[%s1 + $0x128] sm:$0xff]
      %v253 = vld [vmem:[%s1 + $0x130] sm:$0xff]
      %v254 = vld [vmem:[%s1 + $0x138] sm:$0xff]
      %v255 = vld [vmem:[%s1 + $0x140] sm:$0xff]
      %v256 = vld [vmem:[%s1 + $0x148] sm:$0xff]
      %v257 = vld [vmem:[%s1 + $0x150] sm:$0xff]
      %v258 = vld [vmem:[%s1 + $0x158] sm:$0xff]
      %v259 = vld [vmem:[%s1 + $0x160] sm:$0xff]
      %v260 = vld [vmem:[%s1 + $0x168] sm:$0xff]
      %v261 = vld [vmem:[%s1 + $0x170] sm:$0xff]
      %v262 = vld [vmem:[%s1 + $0x178] sm:$0xff]
      %263 = vmatprep.subr.mxu0 %v216
      %264 = vmatpush1.msra.mxu0 %v215
      %265 = vmatprep.subr.mxu0 %v219
      %266 = vmatpush1.msra.mxu0 %v218
      %267 = vmatprep.subr.mxu0 %v222
      %268 = vmatpush1.msra.mxu0 %v221
      %269 = vmatprep.subr.mxu0 %v225
      %270 = vmatpush1.msra.mxu0 %v224
      %271 = vmatprep.subr.mxu0 %v228
      %272 = vmatpush1.msra.mxu0 %v227
      %273 = vmatprep.subr.mxu0 %v231
      %274 = vmatpush1.msra.mxu0 %v230
      %275 = vmatprep.subr.mxu0 %v234
      %276 = vmatpush1.msra.mxu0 %v233
      %277 = vmatprep.subr.mxu0 %v237
      %278 = vmatpush1.msra.mxu0 %v236
      %279 = vmatprep.subr.mxu0 %v240
      %280 = vmatpush1.msra.mxu0 %v239
      %281 = vmatprep.subr.mxu0 %v243
      %282 = vmatpush1.msra.mxu0 %v242
      %283 = vmatprep.subr.mxu0 %v246
      %284 = vmatpush1.msra.mxu0 %v245
      %285 = vmatprep.subr.mxu0 %v249
      %286 = vmatpush1.msra.mxu0 %v248
      %287 = vmatprep.subr.mxu0 %v252
      %288 = vmatpush1.msra.mxu0 %v251
      %289 = vmatprep.subr.mxu0 %v255
      %290 = vmatpush1.msra.mxu0 %v254
      %291 = vmatprep.subr.mxu0 %v258
      %292 = vmatpush1.msra.mxu0 %v257
      %293 = vmatprep.subr.mxu0 %v261
      %294 = vmatpush1.msra.mxu0 %v260
      %295 = vmatprep.subr.mxu0 0.0
      %296 = vmatpush1.msra.mxu0 0.0
      %297 = vmatprep.subr.mxu0 0.0
      %298 = vmatpush1.msra.mxu0 0.0
      %299 = vmatprep.subr.mxu0 0.0
      %300 = vmatpush1.msra.mxu0 0.0
      %301 = vmatprep.subr.mxu0 0.0
      %302 = vmatpush1.msra.mxu0 0.0
      %303 = vmatprep.subr.mxu0 0.0
      %304 = vmatpush1.msra.mxu0 0.0
      %305 = vmatprep.subr.mxu0 0.0
      %306 = vmatpush1.msra.mxu0 0.0
      %307 = vmatprep.subr.mxu0 0.0
      %308 = vmatpush1.msra.mxu0 0.0
      %309 = vmatprep.subr.mxu0 0.0
      %310 = vmatpush1.msra.mxu0 0.0
      %311 = vmatprep.subr.mxu0 0.0
      %312 = vmatpush1.msra.mxu0 0.0
      %313 = vmatprep.subr.mxu0 0.0
      %314 = vmatpush1.msra.mxu0 0.0
      %315 = vmatprep.subr.mxu0 0.0
      %316 = vmatpush1.msra.mxu0 0.0
      %317 = vmatprep.subr.mxu0 0.0
      %318 = vmatpush1.msra.mxu0 0.0
      %319 = vmatprep.subr.mxu0 0.0
      %320 = vmatpush1.msra.mxu0 0.0
      %321 = vmatprep.subr.mxu0 0.0
      %322 = vmatpush1.msra.mxu0 0.0
      %323 = vmatprep.subr.mxu0 0.0
      %324 = vmatpush1.msra.mxu0 0.0
      %325 = vmatprep.subr.mxu0 0.0
      %326 = vmatpush1.msra.mxu0 0.0
      %327 = vmatprep.mubr.f32.mxu0 0.0
      %328 = vmatmul.mubr.f32.gmra.mrb[0].mxu0 %v190
      %v329 = vpop.f32.mrb[0].mxu0
      %v330 = vadd.f32 0.0, %v329
      %v331 = vpop.f32.mrb[0].mxu0
      %v332 = vadd.f32 0.0, %v331
      %333 = vmatprep.mubr.f32.mxu0 0.0
      %334 = vmatmul.mubr.f32.gmra.mrb[0].mxu0 %v191
      %v335 = vpop.f32.mrb[0].mxu0
      %v336 = vadd.f32 0.0, %v335
      %v337 = vpop.f32.mrb[0].mxu0
      %v338 = vadd.f32 0.0, %v337
      %339 = vmatprep.mubr.f32.mxu0 0.0
      %340 = vmatmul.mubr.f32.gmra.mrb[0].mxu0 %v192
      %v341 = vpop.f32.mrb[0].mxu0
      %v342 = vadd.f32 0.0, %v341
      %v343 = vpop.f32.mrb[0].mxu0
      %v344 = vadd.f32 0.0, %v343
      %345 = vmatprep.mubr.f32.mxu0 0.0
      %346 = vmatmul.mubr.f32.gmra.mrb[0].mxu0 %v193
      %v347 = vpop.f32.mrb[0].mxu0
      %v348 = vadd.f32 0.0, %v347
      %v349 = vpop.f32.mrb[0].mxu0
      %v350 = vadd.f32 0.0, %v349
      %351 = vmatprep.mubr.f32.mxu0 0.0
      %352 = vmatmul.mubr.f32.gmra.mrb[0].mxu0 %v194
      %v353 = vpop.f32.mrb[0].mxu0
      %v354 = vadd.f32 0.0, %v353
      %v355 = vpop.f32.mrb[0].mxu0
      %v356 = vadd.f32 0.0, %v355
      %357 = vmatprep.mubr.f32.mxu0 0.0
      %358 = vmatmul.mubr.f32.gmra.mrb[0].mxu0 %v195
      %v359 = vpop.f32.mrb[0].mxu0
      %v360 = vadd.f32 0.0, %v359
      %v361 = vpop.f32.mrb[0].mxu0
      %v362 = vadd.f32 0.0, %v361
      %363 = vmatprep.mubr.f32.mxu0 0.0
      %364 = vmatmul.mubr.f32.gmra.mrb[0].mxu0 %v196
      %v365 = vpop.f32.mrb[0].mxu0
      %v366 = vadd.f32 0.0, %v365
      %v367 = vpop.f32.mrb[0].mxu0
      %v368 = vadd.f32 0.0, %v367
      %369 = vmatprep.mubr.f32.mxu0 0.0
      %370 = vmatmul.mubr.f32.gmra.mrb[0].mxu0 %v197
      %v371 = vpop.f32.mrb[0].mxu0
      %v372 = vadd.f32 0.0, %v371
      %v373 = vpop.f32.mrb[0].mxu0
      %v374 = vadd.f32 0.0, %v373
      %375 = vmatprep.mubr.f32.mxu0 0.0
      %376 = vmatmul.mubr.f32.gmra.mrb[0].mxu0 %v198
      %v377 = vpop.f32.mrb[0].mxu0
      %v378 = vadd.f32 0.0, %v377
      %v379 = vpop.f32.mrb[0].mxu0
      %v380 = vadd.f32 0.0, %v379
      %381 = vmatprep.mubr.f32.mxu0 0.0
      %382 = vmatmul.mubr.f32.gmra.mrb[0].mxu0 %v199
      %v383 = vpop.f32.mrb[0].mxu0
      %v384 = vadd.f32 0.0, %v383
      %v385 = vpop.f32.mrb[0].mxu0
      %v386 = vadd.f32 0.0, %v385
      %387 = vmatprep.mubr.f32.mxu0 0.0
      %388 = vmatmul.mubr.f32.gmra.mrb[0].mxu0 %v200
      %v389 = vpop.f32.mrb[0].mxu0
      %v390 = vadd.f32 0.0, %v389
      %v391 = vpop.f32.mrb[0].mxu0
      %v392 = vadd.f32 0.0, %v391
      %393 = vmatprep.mubr.f32.mxu0 0.0
      %394 = vmatmul.mubr.f32.gmra.mrb[0].mxu0 %v201
      %v395 = vpop.f32.mrb[0].mxu0
      %v396 = vadd.f32 0.0, %v395
      %v397 = vpop.f32.mrb[0].mxu0
      %v398 = vadd.f32 0.0, %v397
      %399 = vmatprep.mubr.f32.mxu0 0.0
      %400 = vmatmul.mubr.f32.gmra.mrb[0].mxu0 %v202
      %v401 = vpop.f32.mrb[0].mxu0
      %v402 = vadd.f32 0.0, %v401
      %v403 = vpop.f32.mrb[0].mxu0
      %v404 = vadd.f32 0.0, %v403
      %405 = vmatprep.mubr.f32.mxu0 0.0
      %406 = vmatmul.mubr.f32.gmra.mrb[0].mxu0 %v203
      %v407 = vpop.f32.mrb[0].mxu0
      %v408 = vadd.f32 0.0, %v407
      %v409 = vpop.f32.mrb[0].mxu0
      %v410 = vadd.f32 0.0, %v409
      %411 = vmatprep.mubr.f32.mxu0 0.0
      %412 = vmatmul.mubr.f32.gmra.mrb[0].mxu0 %v204
      %v413 = vpop.f32.mrb[0].mxu0
      %v414 = vadd.f32 0.0, %v413
      %v415 = vpop.f32.mrb[0].mxu0
      %v416 = vadd.f32 0.0, %v415
      %417 = vmatprep.mubr.f32.mxu0 0.0
      %418 = vmatmul.mubr.f32.gmra.mrb[0].mxu0 %v205
      %v419 = vpop.f32.mrb[0].mxu0
      %v420 = vadd.f32 0.0, %v419
      %v421 = vpop.f32.mrb[0].mxu0
      %v422 = vadd.f32 0.0, %v421
      %423 = vdwg.mxu0
      %424 = vmatprep.subr.mxu0 0.0
      %425 = vmatpush1.msra.mxu0 %v217
      %426 = vmatprep.subr.mxu0 0.0
      %427 = vmatpush1.msra.mxu0 %v220
      %428 = vmatprep.subr.mxu0 0.0
      %429 = vmatpush1.msra.mxu0 %v223
      %430 = vmatprep.subr.mxu0 0.0
      %431 = vmatpush1.msra.mxu0 %v226
      %432 = vmatprep.subr.mxu0 0.0
      %433 = vmatpush1.msra.mxu0 %v229
      %434 = vmatprep.subr.mxu0 0.0
      %435 = vmatpush1.msra.mxu0 %v232
      %436 = vmatprep.subr.mxu0 0.0
      %437 = vmatpush1.msra.mxu0 %v235
      %438 = vmatprep.subr.mxu0 0.0
      %439 = vmatpush1.msra.mxu0 %v238
      %440 = vmatprep.subr.mxu0 0.0
      %441 = vmatpush1.msra.mxu0 %v241
      %442 = vmatprep.subr.mxu0 0.0
      %443 = vmatpush1.msra.mxu0 %v244
      %444 = vmatprep.subr.mxu0 0.0
      %445 = vmatpush1.msra.mxu0 %v247
      %446 = vmatprep.subr.mxu0 0.0
      %447 = vmatpush1.msra.mxu0 %v250
      %448 = vmatprep.subr.mxu0 0.0
      %449 = vmatpush1.msra.mxu0 %v253
      %450 = vmatprep.subr.mxu0 0.0
      %451 = vmatpush1.msra.mxu0 %v256
      %452 = vmatprep.subr.mxu0 0.0
      %453 = vmatpush1.msra.mxu0 %v259
      %454 = vmatprep.subr.mxu0 0.0
      %455 = vmatpush1.msra.mxu0 %v262
      %456 = vmatprep.subr.mxu0 0.0
      %457 = vmatpush1.msra.mxu0 0.0
      %458 = vmatprep.subr.mxu0 0.0
      %459 = vmatpush1.msra.mxu0 0.0
      %460 = vmatprep.subr.mxu0 0.0
      %461 = vmatpush1.msra.mxu0 0.0
      %462 = vmatprep.subr.mxu0 0.0
      %463 = vmatpush1.msra.mxu0 0.0
      %464 = vmatprep.subr.mxu0 0.0
      %465 = vmatpush1.msra.mxu0 0.0
      %466 = vmatprep.subr.mxu0 0.0
      %467 = vmatpush1.msra.mxu0 0.0
      %468 = vmatprep.subr.mxu0 0.0
      %469 = vmatpush1.msra.mxu0 0.0
      %470 = vmatprep.subr.mxu0 0.0
      %471 = vmatpush1.msra.mxu0 0.0
      %472 = vmatprep.subr.mxu0 0.0
      %473 = vmatpush1.msra.mxu0 0.0
      %474 = vmatprep.subr.mxu0 0.0
      %475 = vmatpush1.msra.mxu0 0.0
      %476 = vmatprep.subr.mxu0 0.0
      %477 = vmatpush1.msra.mxu0 0.0
      %478 = vmatprep.subr.mxu0 0.0
      %479 = vmatpush1.msra.mxu0 0.0
      %480 = vmatprep.subr.mxu0 0.0
      %481 = vmatpush1.msra.mxu0 0.0
      %482 = vmatprep.subr.mxu0 0.0
      %483 = vmatpush1.msra.mxu0 0.0
      %484 = vmatprep.subr.mxu0 0.0
      %485 = vmatpush1.msra.mxu0 0.0
      %486 = vmatprep.subr.mxu0 0.0
      %487 = vmatpush1.msra.mxu0 0.0
      %488 = vmatprep.mubr.f32.mxu0 0.0
      %489 = vmatmul.mubr.f32.gmra.mrb[0].mxu0 %v190
      %v490 = vpop.f32.mrb[0].mxu0
      %v491 = vadd.f32 0.0, %v490
      %v492 = vpop.f32.mrb[0].mxu0
      %493 = vmatprep.mubr.f32.mxu0 0.0
      %494 = vmatmul.mubr.f32.gmra.mrb[0].mxu0 %v191
      %v495 = vpop.f32.mrb[0].mxu0
      %v496 = vadd.f32 0.0, %v495
      %v497 = vpop.f32.mrb[0].mxu0
      %498 = vmatprep.mubr.f32.mxu0 0.0
      %499 = vmatmul.mubr.f32.gmra.mrb[0].mxu0 %v192
      %v500 = vpop.f32.mrb[0].mxu0
      %v501 = vadd.f32 0.0, %v500
      %v502 = vpop.f32.mrb[0].mxu0
      %503 = vmatprep.mubr.f32.mxu0 0.0
      %504 = vmatmul.mubr.f32.gmra.mrb[0].mxu0 %v193
      %v505 = vpop.f32.mrb[0].mxu0
      %v506 = vadd.f32 0.0, %v505
      %v507 = vpop.f32.mrb[0].mxu0
      %508 = vmatprep.mubr.f32.mxu0 0.0
      %509 = vmatmul.mubr.f32.gmra.mrb[0].mxu0 %v194
      %v510 = vpop.f32.mrb[0].mxu0
      %v511 = vadd.f32 0.0, %v510
      %v512 = vpop.f32.mrb[0].mxu0
      %513 = vmatprep.mubr.f32.mxu0 0.0
      %514 = vmatmul.mubr.f32.gmra.mrb[0].mxu0 %v195
      %v515 = vpop.f32.mrb[0].mxu0
      %v516 = vadd.f32 0.0, %v515
      %v517 = vpop.f32.mrb[0].mxu0
      %518 = vmatprep.mubr.f32.mxu0 0.0
      %519 = vmatmul.mubr.f32.gmra.mrb[0].mxu0 %v196
      %v520 = vpop.f32.mrb[0].mxu0
      %v521 = vadd.f32 0.0, %v520
      %v522 = vpop.f32.mrb[0].mxu0
      %523 = vmatprep.mubr.f32.mxu0 0.0
      %524 = vmatmul.mubr.f32.gmra.mrb[0].mxu0 %v197
      %v525 = vpop.f32.mrb[0].mxu0
      %v526 = vadd.f32 0.0, %v525
      %v527 = vpop.f32.mrb[0].mxu0
      %528 = vmatprep.mubr.f32.mxu0 0.0
      %529 = vmatmul.mubr.f32.gmra.mrb[0].mxu0 %v198
      %v530 = vpop.f32.mrb[0].mxu0
      %v531 = vadd.f32 0.0, %v530
      %v532 = vpop.f32.mrb[0].mxu0
      %533 = vmatprep.mubr.f32.mxu0 0.0
      %534 = vmatmul.mubr.f32.gmra.mrb[0].mxu0 %v199
      %v535 = vpop.f32.mrb[0].mxu0
      %v536 = vadd.f32 0.0, %v535
      %v537 = vpop.f32.mrb[0].mxu0
      %538 = vmatprep.mubr.f32.mxu0 0.0
      %539 = vmatmul.mubr.f32.gmra.mrb[0].mxu0 %v200
      %v540 = vpop.f32.mrb[0].mxu0
      %v541 = vadd.f32 0.0, %v540
      %v542 = vpop.f32.mrb[0].mxu0
      %543 = vmatprep.mubr.f32.mxu0 0.0
      %544 = vmatmul.mubr.f32.gmra.mrb[0].mxu0 %v201
      %v545 = vpop.f32.mrb[0].mxu0
      %v546 = vadd.f32 0.0, %v545
      %v547 = vpop.f32.mrb[0].mxu0
      %548 = vmatprep.mubr.f32.mxu0 0.0
      %549 = vmatmul.mubr.f32.gmra.mrb[0].mxu0 %v202
      %v550 = vpop.f32.mrb[0].mxu0
      %v551 = vadd.f32 0.0, %v550
      %v552 = vpop.f32.mrb[0].mxu0
      %553 = vmatprep.mubr.f32.mxu0 0.0
      %554 = vmatmul.mubr.f32.gmra.mrb[0].mxu0 %v203
      %v555 = vpop.f32.mrb[0].mxu0
      %v556 = vadd.f32 0.0, %v555
      %v557 = vpop.f32.mrb[0].mxu0
      %558 = vmatprep.mubr.f32.mxu0 0.0
      %559 = vmatmul.mubr.f32.gmra.mrb[0].mxu0 %v204
      %v560 = vpop.f32.mrb[0].mxu0
      %v561 = vadd.f32 0.0, %v560
      %v562 = vpop.f32.mrb[0].mxu0
      %563 = vmatprep.mubr.f32.mxu0 0.0
      %564 = vmatmul.mubr.f32.gmra.mrb[0].mxu0 %v205
      %v565 = vpop.f32.mrb[0].mxu0
      %v566 = vadd.f32 0.0, %v565
      %v567 = vpop.f32.mrb[0].mxu0
      %568 = vdwg.mxu0
      %v569 = vrot.slane %v330, 7
      %v570 = vrot.slane %v336, 7
      %v571 = vrot.slane %v342, 7
      %v572 = vrot.slane %v348, 7
      %v573 = vrot.slane %v354, 7
      %v574 = vrot.slane %v360, 7
      %v575 = vrot.slane %v366, 7
      %v576 = vrot.slane %v372, 7
      %v577 = vrot.slane %v378, 7
      %v578 = vrot.slane %v384, 7
      %v579 = vrot.slane %v390, 7
      %v580 = vrot.slane %v396, 7
      %v581 = vrot.slane %v402, 7
      %v582 = vrot.slane %v408, 7
      %v583 = vrot.slane %v414, 7
      %v584 = vrot.slane %v420, 7
      %vm585 = vcmp.lt.s32.totalorder %v207, 1
      %v586 = vsel %vm585, %v583, %v584
      %v587 = vsel %vm585, %v582, %v583
      %v588 = vsel %vm585, %v581, %v582
      %v589 = vsel %vm585, %v580, %v581
      %v590 = vsel %vm585, %v579, %v580
      %v591 = vsel %vm585, %v578, %v579
      %v592 = vsel %vm585, %v577, %v578
      %v593 = vsel %vm585, %v576, %v577
      %v594 = vsel %vm585, %v575, %v576
      %v595 = vsel %vm585, %v574, %v575
      %v596 = vsel %vm585, %v573, %v574
      %v597 = vsel %vm585, %v572, %v573
      %v598 = vsel %vm585, %v571, %v572
      %v599 = vsel %vm585, %v570, %v571
      %v600 = vsel %vm585, %v569, %v570
      %v601 = vsel %vm585, %v584, %v569
      %vm602 = vcmp.lt.s32.totalorder %v208, 1
      %vm603 = vcmp.lt.s32.totalorder %v209, 1
      %vm604 = vcmp.lt.s32.totalorder %v210, 1
      %vm605 = vcmp.lt.s32.totalorder %v211, 1
      %vm606 = vcmp.lt.s32.totalorder %v212, 1
      %vm607 = vcmp.lt.s32.totalorder %v213, 1
      %vm608 = vcmp.lt.s32.totalorder %v214, 1
      %v609 = vsel %vm585, 1, 0
      %v610 = vsel %vm602, 1, 0
      %v611 = vsel %vm603, 1, 0
      %v612 = vsel %vm604, 1, 0
      %v613 = vsel %vm605, 1, 0
      %v614 = vsel %vm606, 1, 0
      %v615 = vsel %vm607, 1, 0
      %v616 = vsel %vm608, 1, 0
      %vm617 = vcmp.eq.s32.totalorder %v609, 1
      %vm618 = vcmp.eq.s32.totalorder %v610, 1
      %vm619 = vcmp.eq.s32.totalorder %v611, 1
      %vm620 = vcmp.eq.s32.totalorder %v612, 1
      %vm621 = vcmp.eq.s32.totalorder %v613, 1
      %vm622 = vcmp.eq.s32.totalorder %v614, 1
      %vm623 = vcmp.eq.s32.totalorder %v615, 1
      %vm624 = vcmp.eq.s32.totalorder %v616, 1
      %v625 = vsel %vm617, 0.0, %v601
      %v626 = vsel %vm618, 0.0, %v600
      %v627 = vsel %vm619, 0.0, %v599
      %v628 = vsel %vm620, 0.0, %v598
      %v629 = vsel %vm621, 0.0, %v597
      %v630 = vsel %vm622, 0.0, %v596
      %v631 = vsel %vm623, 0.0, %v595
      %v632 = vsel %vm624, 0.0, %v594
      %v633 = vsel %vm617, 0.0, %v593
      %v634 = vsel %vm618, 0.0, %v592
      %v635 = vsel %vm619, 0.0, %v591
      %v636 = vsel %vm620, 0.0, %v590
      %v637 = vsel %vm621, 0.0, %v589
      %v638 = vsel %vm622, 0.0, %v588
      %v639 = vsel %vm623, 0.0, %v587
      %v640 = vsel %vm624, 0.0, %v586
      %v641 = vadd.f32 %v625, %v332
      %v642 = vadd.f32 %v626, %v338
      %v643 = vadd.f32 %v627, %v344
      %v644 = vadd.f32 %v628, %v350
      %v645 = vadd.f32 %v629, %v356
      %v646 = vadd.f32 %v630, %v362
      %v647 = vadd.f32 %v631, %v368
      %v648 = vadd.f32 %v632, %v374
      %v649 = vadd.f32 %v633, %v380
      %v650 = vadd.f32 %v634, %v386
      %v651 = vadd.f32 %v635, %v392
      %v652 = vadd.f32 %v636, %v398
      %v653 = vadd.f32 %v637, %v404
      %v654 = vadd.f32 %v638, %v410
      %v655 = vadd.f32 %v639, %v416
      %v656 = vadd.f32 %v640, %v422
      %v657 = vrot.slane %v491, 1
      %v658 = vrot.slane %v496, 1
      %v659 = vrot.slane %v501, 1
      %v660 = vrot.slane %v506, 1
      %v661 = vrot.slane %v511, 1
      %v662 = vrot.slane %v516, 1
      %v663 = vrot.slane %v521, 1
      %v664 = vrot.slane %v526, 1
      %v665 = vrot.slane %v531, 1
      %v666 = vrot.slane %v536, 1
      %v667 = vrot.slane %v541, 1
      %v668 = vrot.slane %v546, 1
      %v669 = vrot.slane %v551, 1
      %v670 = vrot.slane %v556, 1
      %v671 = vrot.slane %v561, 1
      %v672 = vrot.slane %v566, 1
      %vm673 = vcmp.lt.s32.totalorder %v207, 7
      %v674 = vsel %vm673, %v671, %v672
      %v675 = vsel %vm673, %v670, %v671
      %v676 = vsel %vm673, %v669, %v670
      %v677 = vsel %vm673, %v668, %v669
      %v678 = vsel %vm673, %v667, %v668
      %v679 = vsel %vm673, %v666, %v667
      %v680 = vsel %vm673, %v665, %v666
      %v681 = vsel %vm673, %v664, %v665
      %v682 = vsel %vm673, %v663, %v664
      %v683 = vsel %vm673, %v662, %v663
      %v684 = vsel %vm673, %v661, %v662
      %v685 = vsel %vm673, %v660, %v661
      %v686 = vsel %vm673, %v659, %v660
      %v687 = vsel %vm673, %v658, %v659
      %v688 = vsel %vm673, %v657, %v658
      %v689 = vsel %vm673, %v672, %v657
      %vm690 = vcmp.ge.s32.totalorder %v207, 63
      %vm691 = vcmp.ge.s32.totalorder %v208, 63
      %vm692 = vcmp.ge.s32.totalorder %v209, 63
      %vm693 = vcmp.ge.s32.totalorder %v210, 63
      %vm694 = vcmp.ge.s32.totalorder %v211, 63
      %vm695 = vcmp.ge.s32.totalorder %v212, 63
      %vm696 = vcmp.ge.s32.totalorder %v213, 63
      %vm697 = vcmp.ge.s32.totalorder %v214, 63
      %v698 = vsel %vm690, 1, 0
      %v699 = vsel %vm691, 1, 0
      %v700 = vsel %vm692, 1, 0
      %v701 = vsel %vm693, 1, 0
      %v702 = vsel %vm694, 1, 0
      %v703 = vsel %vm695, 1, 0
      %v704 = vsel %vm696, 1, 0
      %v705 = vsel %vm697, 1, 0
      %vm706 = vcmp.eq.s32.totalorder %v698, 1
      %vm707 = vcmp.eq.s32.totalorder %v699, 1
      %vm708 = vcmp.eq.s32.totalorder %v700, 1
      %vm709 = vcmp.eq.s32.totalorder %v701, 1
      %vm710 = vcmp.eq.s32.totalorder %v702, 1
      %vm711 = vcmp.eq.s32.totalorder %v703, 1
      %vm712 = vcmp.eq.s32.totalorder %v704, 1
      %vm713 = vcmp.eq.s32.totalorder %v705, 1
      %v714 = vsel %vm706, 0.0, %v688
      %v715 = vsel %vm707, 0.0, %v687
      %v716 = vsel %vm708, 0.0, %v686
      %v717 = vsel %vm709, 0.0, %v685
      %v718 = vsel %vm710, 0.0, %v684
      %v719 = vsel %vm711, 0.0, %v683
      %v720 = vsel %vm712, 0.0, %v682
      %v721 = vsel %vm713, 0.0, %v681
      %v722 = vsel %vm706, 0.0, %v680
      %v723 = vsel %vm707, 0.0, %v679
      %v724 = vsel %vm708, 0.0, %v678
      %v725 = vsel %vm709, 0.0, %v677
      %v726 = vsel %vm710, 0.0, %v676
      %v727 = vsel %vm711, 0.0, %v675
      %v728 = vsel %vm712, 0.0, %v674
      %v729 = vsel %vm713, 0.0, %v689
      %v730 = vadd.f32 %v641, %v714
      %v731 = vadd.f32 %v642, %v715
      %v732 = vadd.f32 %v643, %v716
      %v733 = vadd.f32 %v644, %v717
      %v734 = vadd.f32 %v645, %v718
      %v735 = vadd.f32 %v646, %v719
      %v736 = vadd.f32 %v647, %v720
      %v737 = vadd.f32 %v648, %v721
      %v738 = vadd.f32 %v649, %v722
      %v739 = vadd.f32 %v650, %v723
      %v740 = vadd.f32 %v651, %v724
      %v741 = vadd.f32 %v652, %v725
      %v742 = vadd.f32 %v653, %v726
      %v743 = vadd.f32 %v654, %v727
      %v744 = vadd.f32 %v655, %v728
      %v745 = vadd.f32 %v656, %v729
      %746 = vst [vmem:[%s184] sm:$0xff] %v730
      %747 = vst [vmem:[%s184 + $0x8] sm:$0xff] %v731
      %748 = vst [vmem:[%s184 + $0x10] sm:$0xff] %v732
      %749 = vst [vmem:[%s184 + $0x18] sm:$0xff] %v733
      %750 = vst [vmem:[%s184 + $0x20] sm:$0xff] %v734
      %751 = vst [vmem:[%s184 + $0x28] sm:$0xff] %v735
      %752 = vst [vmem:[%s184 + $0x30] sm:$0xff] %v736
      %753 = vst [vmem:[%s184 + $0x38] sm:$0xff] %v737
      %754 = vst [vmem:[%s184 + $0x40] sm:$0xff] %v738
      %755 = vst [vmem:[%s184 + $0x48] sm:$0xff] %v739
      %756 = vst [vmem:[%s184 + $0x50] sm:$0xff] %v740
      %757 = vst [vmem:[%s184 + $0x58] sm:$0xff] %v741
      %758 = vst [vmem:[%s184 + $0x60] sm:$0xff] %v742
      %759 = vst [vmem:[%s184 + $0x68] sm:$0xff] %v743
      %760 = vst [vmem:[%s184 + $0x70] sm:$0xff] %v744
      %761 = vst [vmem:[%s184 + $0x78] sm:$0xff] %v745
      %v762 = vadd.f32 %v730, %v731
      %v763 = vadd.f32 %v762, %v732
      %v764 = vadd.f32 %v763, %v733
      %v765 = vadd.f32 %v764, %v734
      %v766 = vadd.f32 %v765, %v735
      %v767 = vadd.f32 %v766, %v736
      %v768 = vadd.f32 %v767, %v737
      %v769 = vadd.f32 %v768, %v738
      %v770 = vadd.f32 %v769, %v739
      %v771 = vadd.f32 %v770, %v740
      %v772 = vadd.f32 %v771, %v741
      %v773 = vadd.f32 %v772, %v742
      %v774 = vadd.f32 %v773, %v743
      %v775 = vadd.f32 %v774, %v744
      %v776 = vadd.f32 %v775, %v745
      %v777 = vrot.slane %v776, 4
      %v778 = vadd.f32 %v776, %v777
      %v779 = vrot.slane %v778, 2
      %v780 = vadd.f32 %v778, %v779
      %v781 = vrot.slane %v780, 1
      %v782 = vadd.f32 %v780, %v781
      %v783 = vmul.f32 %v730, %v730
      %v784 = vmul.f32 %v731, %v731
      %v785 = vmul.f32 %v732, %v732
      %v786 = vmul.f32 %v733, %v733
      %v787 = vmul.f32 %v734, %v734
      %v788 = vmul.f32 %v735, %v735
      %v789 = vmul.f32 %v736, %v736
      %v790 = vmul.f32 %v737, %v737
      %v791 = vmul.f32 %v738, %v738
      %v792 = vmul.f32 %v739, %v739
      %v793 = vmul.f32 %v740, %v740
      %v794 = vmul.f32 %v741, %v741
      %v795 = vmul.f32 %v742, %v742
      %v796 = vmul.f32 %v743, %v743
      %v797 = vmul.f32 %v744, %v744
      %v798 = vmul.f32 %v745, %v745
      %v799 = vadd.f32 %v783, %v784
      %v800 = vadd.f32 %v799, %v785
      %v801 = vadd.f32 %v800, %v786
      %v802 = vadd.f32 %v801, %v787
      %v803 = vadd.f32 %v802, %v788
      %v804 = vadd.f32 %v803, %v789
      %v805 = vadd.f32 %v804, %v790
      %v806 = vadd.f32 %v805, %v791
      %v807 = vadd.f32 %v806, %v792
      %v808 = vadd.f32 %v807, %v793
      %v809 = vadd.f32 %v808, %v794
      %v810 = vadd.f32 %v809, %v795
      %v811 = vadd.f32 %v810, %v796
      %v812 = vadd.f32 %v811, %v797
      %v813 = vadd.f32 %v812, %v798
      %v814 = vrot.slane %v813, 4
      %v815 = vadd.f32 %v813, %v814
      %v816 = vrot.slane %v815, 2
      %v817 = vadd.f32 %v815, %v816
      %v818 = vrot.slane %v817, 1
      %v819 = vadd.f32 %v817, %v818
      %vm820 = vcmask 1040384
      %v821 = vsel %vm820, %v782, %v819
      %822 = vst [vmem:[%s189] sm:$0x3] %v821
      %s823 = smul.u32 2, %s15
      %p824 = scmp.lt.s32.totalorder %s823, 3
      %s825 = scalar_select %p824, %s823, 3
      %s826 = smul.addr %s825, 8
      %s827 = smul.addr %s826, 8
      %s828 = scalar_lea.vmem %s2, %s827
      %p829 = scmp.lt.s32.totalorder %s15, 1
      %s830 = scalar_select %p829, %s15, 1
      %s831 = smul.addr %s830, 2
      %s832 = scalar_lea.vmem %s3, %s831
      // Predicated region
      $region29: #{basic_conv_res_block.3} parent=27 // pred_check
        %p833 = pneg %p80
      $region30: #{basic_conv_res_block.3} parent=27 // pred_check_branch
        %835 = sbr.rel (%p833) target = $region32
      $region31: #{basic_conv_res_block.3} parent=27 // pred_region
        %s836 = smul.u32 2, %s15
      $region32: #{basic_conv_res_block.3} parent=27 // pred_fallthru
        _
      // Predicated region
      $region33: #{basic_conv_res_block.3} parent=27 // pred_check
        %p837 = pneg %p106
      $region34: #{basic_conv_res_block.3} parent=27 // pred_check_branch
        %839 = sbr.rel (%p837) target = $region36
      $region35: #{basic_conv_res_block.3} parent=27 // pred_region
        _
      $region36: #{basic_conv_res_block.3} parent=27 // pred_fallthru
        _
    $region28: #{basic_conv_res_block.3} parent=5 // pred_fallthru
      _
    %p840 = scmp.le.s32.totalorder 2, %s10
    // Predicated region
    $region37: #{basic_conv_res_block.3} parent=5 // pred_check
      %p841 = pneg %p840
    $region38: #{basic_conv_res_block.3} parent=5 // pred_check_branch
      %843 = sbr.rel (%p841) target = $region40
    $region39: #{basic_conv_res_block.3} parent=5 // pred_region
      %s844 = ssub.s32 %s10, 2
      // Predicated region
      $region41: #{basic_conv_res_block.3} parent=39 // pred_check
        %p845 = pneg %p86
      $region42: #{basic_conv_res_block.3} parent=39 // pred_check_branch
        %847 = sbr.rel (%p845) target = $region44
      $region43: #{basic_conv_res_block.3} parent=39 // pred_region
        %s848 = smul.u32 2, %s16
        %p849 = scmp.lt.s32.totalorder %s848, 3
        %s850 = scalar_select %p849, %s848, 3
        %s851 = smul.addr %s850, 8
        %s852 = smul.addr %s851, 8
        %s853 = scalar_lea.vmem %s2, %s852
      $region44: #{basic_conv_res_block.3} parent=39 // pred_fallthru
        _
      // Predicated region
      $region45: #{basic_conv_res_block.3} parent=39 // pred_check
        %p854 = pneg %p112
      $region46: #{basic_conv_res_block.3} parent=39 // pred_check_branch
        %856 = sbr.rel (%p854) target = $region48
      $region47: #{basic_conv_res_block.3} parent=39 // pred_region
        %p857 = scmp.lt.s32.totalorder %s16, 1
        %s858 = scalar_select %p857, %s16, 1
        %s859 = smul.addr %s858, 2
        %s860 = scalar_lea.vmem %s3, %s859
      $region48: #{basic_conv_res_block.3} parent=39 // pred_fallthru
        _
    $region40: #{basic_conv_res_block.3} parent=5 // pred_fallthru
      _
  $region6: #{basic_conv_res_block.3} parent=0 // loop_footer
    %s14 = sadd.s32 1, %s10
  $region7: #{basic_conv_res_block.3} parent=0 // loop_footer_branch
    %9 = sbr.rel target = $region3
  $region8: #{basic_conv_res_block.3} parent=0 // loop_exit
    _

// kernel: basic_conv_res_block.4
$region0: #{basic_conv_res_block.4}
  #allocation0 [shape = 'u32[]', space=smem, size = 0x4, offset = 0x4, fixed_abs, tag = 'smem constant byte address 0x4 - core index']
  #allocation1 [shape = 'u32[144,128]{1,0:T(1,128)}', space=vmem, size = 0x12000, scoped, tag = 'internal scratch']
  %s0 = inlined_call_operand.vmem [shape: f32[4,64,128], index: 0, kind: input, shape index: {}]
  %s1 = inlined_call_operand.vmem [shape: f32[2,128], index: 1, kind: input, shape index: {}]
  %s2 = inlined_call_operand.vmem [shape: f32[128,384], index: 2, kind: input, shape index: {}]
  %s3 = inlined_call_operand.vmem [shape: f32[4,64,128], index: 3, kind: output, shape index: {0}]
  %s4 = inlined_call_operand.vmem [shape: f32[2,2,128], index: 4, kind: output, shape index: {1}]
  %5 = xla_tuple %s3, %s4
  %s6 = sld [smem:[#allocation0]]
  $region53: #{basic_conv_res_block.4} parent=0
    _
  %s8 = ssub.s32 1, %s6
  %s9 = scalar_select 0, %s8, %s6
  loop: start=0, step=1, limit=4
  $region2: #{basic_conv_res_block.4} parent=0 // loop_pre_header
    _
  $region3: #{basic_conv_res_block.4} parent=0 // loop_header
    %s11 = sphi 0, %s15
    %p12 = scmp.ge.s32.totalorder %s11, 4
    %s21 = sphi 0, %s23
    %s24 = sphi 0, %s21
    %s25 = sphi 0, %s24
    %s41 = sphi 0, %s25
    %s45 = sphi 0, %s45
    %s47 = sphi 0, %s45
    %s48 = sphi 0, %s47
    %s62 = sphi 0, %s48
    %s66 = sphi 0, %s66
    %s68 = sphi 0, %s66
    %s69 = sphi 0, %s68
    %s83 = sphi 0, %s69
    %s89 = sphi 0, %s91
    %s92 = sphi 0, %s89
    %s93 = sphi 0, %s92
    %s109 = sphi 0, %s93
    %s115 = sphi 0, %s117
    %s118 = sphi 0, %s115
    %s119 = sphi 0, %s118
    %s135 = sphi 0, %s119
  $region4: #{basic_conv_res_block.4} parent=0 // loop_header_branch
    %14 = sbr.rel (%p12) target = $region8
  $region5: #{basic_conv_res_block.4} parent=0 // loop_body
    %s16 = ssub.s32 %s11, 1
    %s17 = ssub.s32 %s11, 2
    %s18 = sadd.s32 %s11, 1
    %s19 = ssub.s32 %s11, %s18
    %p20 = scmp.eq.s32.totalorder %s19, 0
    %s22 = sadd.s32 %s21, 1
    %s23 = scalar_select %p20, %s21, %s22
    %p26 = pneg %p20
    %p27 = scmp.eq.s32.totalorder %s11, 1
    %p28 = por %p26, %p27
    %p29 = scmp.ne.s32.totalorder %s21, %s24
    %p30 = scmp.eq.s32.totalorder %s11, 0
    %p31 = por %p29, %p30
    %p32 = scmp.ne.s32.totalorder %s21, %s24
    %p33 = scmp.eq.s32.totalorder %s16, 1
    %p34 = por %p32, %p33
    %p35 = scmp.ne.s32.totalorder %s24, %s25
    %p36 = scmp.eq.s32.totalorder %s16, 0
    %p37 = por %p35, %p36
    %p38 = scmp.ne.s32.totalorder %s24, %s25
    %p39 = scmp.eq.s32.totalorder %s17, 1
    %p40 = por %p38, %p39
    %p42 = scmp.ne.s32.totalorder %s25, %s41
    %p43 = scmp.eq.s32.totalorder %s17, 0
    %p44 = por %p42, %p43
    %s46 = sadd.s32 %s45, 1
    %p49 = scmp.eq.s32.totalorder %s11, 1
    %p50 = scmp.ne.s32.totalorder %s45, %s47
    %p51 = scmp.eq.s32.totalorder %s11, 0
    %p52 = por %p50, %p51
    %p53 = scmp.ne.s32.totalorder %s45, %s47
    %p54 = scmp.eq.s32.totalorder %s16, 1
    %p55 = por %p53, %p54
    %p56 = scmp.ne.s32.totalorder %s47, %s48
    %p57 = scmp.eq.s32.totalorder %s16, 0
    %p58 = por %p56, %p57
    %p59 = scmp.ne.s32.totalorder %s47, %s48
    %p60 = scmp.eq.s32.totalorder %s17, 1
    %p61 = por %p59, %p60
    %p63 = scmp.ne.s32.totalorder %s48, %s62
    %p64 = scmp.eq.s32.totalorder %s17, 0
    %p65 = por %p63, %p64
    %s67 = sadd.s32 %s66, 1
    %p70 = scmp.eq.s32.totalorder %s11, 1
    %p71 = scmp.ne.s32.totalorder %s66, %s68
    %p72 = scmp.eq.s32.totalorder %s11, 0
    %p73 = por %p71, %p72
    %p74 = scmp.ne.s32.totalorder %s66, %s68
    %p75 = scmp.eq.s32.totalorder %s16, 1
    %p76 = por %p74, %p75
    %p77 = scmp.ne.s32.totalorder %s68, %s69
    %p78 = scmp.eq.s32.totalorder %s16, 0
    %p79 = por %p77, %p78
    %p80 = scmp.ne.s32.totalorder %s68, %s69
    %p81 = scmp.eq.s32.totalorder %s17, 1
    %p82 = por %p80, %p81
    %p84 = scmp.ne.s32.totalorder %s69, %s83
    %p85 = scmp.eq.s32.totalorder %s17, 0
    %p86 = por %p84, %p85
    %s87 = ssub.s32 %s11, %s18
    %p88 = scmp.eq.s32.totalorder %s87, 0
    %s90 = sadd.s32 %s89, 1
    %s91 = scalar_select %p88, %s89, %s90
    %p94 = pneg %p88
    %p95 = scmp.eq.s32.totalorder %s11, 1
    %p96 = por %p94, %p95
    %p97 = scmp.ne.s32.totalorder %s89, %s92
    %p98 = scmp.eq.s32.totalorder %s11, 0
    %p99 = por %p97, %p98
    %p100 = scmp.ne.s32.totalorder %s89, %s92
    %p101 = scmp.eq.s32.totalorder %s16, 1
    %p102 = por %p100, %p101
    %p103 = scmp.ne.s32.totalorder %s92, %s93
    %p104 = scmp.eq.s32.totalorder %s16, 0
    %p105 = por %p103, %p104
    %p106 = scmp.ne.s32.totalorder %s92, %s93
    %p107 = scmp.eq.s32.totalorder %s17, 1
    %p108 = por %p106, %p107
    %p110 = scmp.ne.s32.totalorder %s93, %s109
    %p111 = scmp.eq.s32.totalorder %s17, 0
    %p112 = por %p110, %p111
    %s113 = ssub.s32 %s11, %s18
    %p114 = scmp.eq.s32.totalorder %s113, 0
    %s116 = sadd.s32 %s115, 1
    %s117 = scalar_select %p114, %s115, %s116
    %p120 = pneg %p114
    %p121 = scmp.eq.s32.totalorder %s11, 1
    %p122 = por %p120, %p121
    %p123 = scmp.ne.s32.totalorder %s115, %s118
    %p124 = scmp.eq.s32.totalorder %s11, 0
    %p125 = por %p123, %p124
    %p126 = scmp.ne.s32.totalorder %s115, %s118
    %p127 = scmp.eq.s32.totalorder %s16, 1
    %p128 = por %p126, %p127
    %p129 = scmp.ne.s32.totalorder %s118, %s119
    %p130 = scmp.eq.s32.totalorder %s16, 0
    %p131 = por %p129, %p130
    %p132 = scmp.ne.s32.totalorder %s118, %s119
    %p133 = scmp.eq.s32.totalorder %s17, 1
    %p134 = por %p132, %p133
    %p136 = scmp.ne.s32.totalorder %s119, %s135
    %p137 = scmp.eq.s32.totalorder %s17, 0
    %p138 = por %p136, %p137
    %p139 = scmp.le.s32.totalorder 1, %s11
    %p140 = scmp.lt.s32.totalorder %s11, 3
    %p141 = pnand %p139, %p140
    %p142 = pneg %p141
    // Predicated region
    $region9: #{basic_conv_res_block.4} parent=5 // pred_check
      _
    $region10: #{basic_conv_res_block.4} parent=5 // pred_check_branch
      %144 = sbr.rel (%p141) target = $region12
    $region11: #{basic_conv_res_block.4} parent=5 // pred_region
      %s145 = ssub.s32 %s11, 1
      // Predicated region
      $region13: #{basic_conv_res_block.4} parent=11 // pred_check
        %p146 = pneg %p58
      $region14: #{basic_conv_res_block.4} parent=11 // pred_check_branch
        %148 = sbr.rel (%p146) target = $region16
      $region15: #{basic_conv_res_block.4} parent=11 // pred_region
        _
      $region16: #{basic_conv_res_block.4} parent=11 // pred_fallthru
        _
      // Predicated region
      $region17: #{basic_conv_res_block.4} parent=11 // pred_check
        %p149 = pneg %p79
      $region18: #{basic_conv_res_block.4} parent=11 // pred_check_branch
        %151 = sbr.rel (%p149) target = $region20
      $region19: #{basic_conv_res_block.4} parent=11 // pred_region
        _
      $region20: #{basic_conv_res_block.4} parent=11 // pred_fallthru
        _
    $region12: #{basic_conv_res_block.4} parent=5 // pred_fallthru
      _
    %p152 = scmp.lt.s32.totalorder %s11, 2
    // Predicated region
    $region21: #{basic_conv_res_block.4} parent=5 // pred_check
      %p153 = pneg %p152
    $region22: #{basic_conv_res_block.4} parent=5 // pred_check_branch
      %155 = sbr.rel (%p153) target = $region24
    $region23: #{basic_conv_res_block.4} parent=5 // pred_region
      // Predicated region
      $region25: #{basic_conv_res_block.4} parent=23 // pred_check
        %p156 = pneg %p31
      $region26: #{basic_conv_res_block.4} parent=23 // pred_check_branch
        %158 = sbr.rel (%p156) target = $region28
      $region27: #{basic_conv_res_block.4} parent=23 // pred_region
        %s159 = smul.u32 2, %s11
        %p160 = scmp.lt.s32.totalorder %s159, 3
        %s161 = scalar_select %p160, %s159, 3
        %s162 = smul.addr %s161, 8
        %s163 = smul.addr %s162, 8
        %s164 = scalar_lea.vmem %s0, %s163
        %s165 = smul.u32 2, %s11
      $region28: #{basic_conv_res_block.4} parent=23 // pred_fallthru
        _
    $region24: #{basic_conv_res_block.4} parent=5 // pred_fallthru
      _
    %p166 = scmp.le.s32.totalorder 1, %s11
    %p167 = scmp.lt.s32.totalorder %s11, 3
    %p168 = pnand %p166, %p167
    %p169 = pneg %p168
    // Predicated region
    $region29: #{basic_conv_res_block.4} parent=5 // pred_check
      _
    $region30: #{basic_conv_res_block.4} parent=5 // pred_check_branch
      %171 = sbr.rel (%p168) target = $region32
    $region31: #{basic_conv_res_block.4} parent=5 // pred_region
      %s172 = ssub.s32 %s11, 1
      %s173 = smul.u32 2, %s16
      %p174 = scmp.lt.s32.totalorder %s173, 3
      %s175 = scalar_select %p174, %s173, 3
      %s176 = smul.addr %s175, 8
      %s177 = smul.addr %s176, 8
      %s178 = scalar_lea.vmem %s0, %s177
      %p179 = pneg %p37
      %p180 = pneg %p34
      %p181 = pneg %p58
      %p182 = pneg %p55
      %p183 = pneg %p79
      %p184 = pneg %p76
      %p185 = pneg %p105
      %p186 = pneg %p102
      %s187 = smul.u32 2, %s16
      %p188 = scmp.lt.s32.totalorder %s187, 3
      %s189 = scalar_select %p188, %s187, 3
      %s190 = smul.addr %s189, 8
      %s191 = smul.addr %s190, 8
      %s192 = scalar_lea.vmem %s3, %s191
      %p193 = pneg %p131
      %p194 = pneg %p128
      %p195 = scmp.lt.s32.totalorder %s16, 1
      %s196 = scalar_select %p195, %s16, 1
      %s197 = smul.addr %s196, 2
      %s198 = scalar_lea.vmem %s4, %s197
      %s199 = smul.u32 2, %s16
      %p200 = scmp.lt.s32.totalorder %s199, 3
      %s201 = scalar_select %p200, %s199, 3
      %s202 = smul.addr %s201, 8
      %s203 = smul.addr %s202, 8
      %s204 = scalar_lea.vmem %s0, %s203
      %s205 = smul.u32 2, %s16
      %s206 = smul.u32 2, %s16
      %p207 = scmp.lt.s32.totalorder %s206, 3
      %s208 = scalar_select %p207, %s206, 3
      %s209 = smul.addr %s208, 8
      %s210 = smul.addr %s209, 8
      %s211 = scalar_lea.vmem %s3, %s210
      %s212 = smul.u32 2, %s16
      %p213 = scmp.lt.s32.totalorder %s16, 1
      %s214 = scalar_select %p213, %s16, 1
      %s215 = smul.addr %s214, 2
      %s216 = scalar_lea.vmem %s4, %s215
      %v217 = vld [vmem:[%s1] sm:$0x3]
      %v218 = vld [vmem:[%s204] sm:$0xff]
      %v219 = vld [vmem:[%s204 + $0x8] sm:$0xff]
      %v220 = vld [vmem:[%s204 + $0x10] sm:$0xff]
      %v221 = vld [vmem:[%s204 + $0x18] sm:$0xff]
      %v222 = vld [vmem:[%s204 + $0x20] sm:$0xff]
      %v223 = vld [vmem:[%s204 + $0x28] sm:$0xff]
      %v224 = vld [vmem:[%s204 + $0x30] sm:$0xff]
      %v225 = vld [vmem:[%s204 + $0x38] sm:$0xff]
      %v226 = vld [vmem:[%s204 + $0x40] sm:$0xff]
      %v227 = vld [vmem:[%s204 + $0x48] sm:$0xff]
      %v228 = vld [vmem:[%s204 + $0x50] sm:$0xff]
      %v229 = vld [vmem:[%s204 + $0x58] sm:$0xff]
      %v230 = vld [vmem:[%s204 + $0x60] sm:$0xff]
      %v231 = vld [vmem:[%s204 + $0x68] sm:$0xff]
      %v232 = vld [vmem:[%s204 + $0x70] sm:$0xff]
      %v233 = vld [vmem:[%s204 + $0x78] sm:$0xff]
      %v234 = vlaneseq
      %v235 = vshrl.u32 %v234, 7
      %v236 = vsub.s32 0, %v235
      %v237 = vrot.slane %v217, %v236
      %v238 = vmul.f32 %v218, %v237
      %v239 = vmul.f32 %v219, %v237
      %v240 = vmul.f32 %v220, %v237
      %v241 = vmul.f32 %v221, %v237
      %v242 = vmul.f32 %v222, %v237
      %v243 = vmul.f32 %v223, %v237
      %v244 = vmul.f32 %v224, %v237
      %v245 = vmul.f32 %v225, %v237
      %v246 = vmul.f32 %v226, %v237
      %v247 = vmul.f32 %v227, %v237
      %v248 = vmul.f32 %v228, %v237
      %v249 = vmul.f32 %v229, %v237
      %v250 = vmul.f32 %v230, %v237
      %v251 = vmul.f32 %v231, %v237
      %v252 = vmul.f32 %v232, %v237
      %v253 = vmul.f32 %v233, %v237
      %v254 = vlaneseq
      %v255 = vshrl.u32 %v254, 7
      %v256 = vsub.s32 1, %v255
      %v257 = vrot.slane %v217, %v256
      %v258 = vadd.f32 %v238, %v257
      %v259 = vadd.f32 %v239, %v257
      %v260 = vadd.f32 %v240, %v257
      %v261 = vadd.f32 %v241, %v257
      %v262 = vadd.f32 %v242, %v257
      %v263 = vadd.f32 %v243, %v257
      %v264 = vadd.f32 %v244, %v257
      %v265 = vadd.f32 %v245, %v257
      %v266 = vadd.f32 %v246, %v257
      %v267 = vadd.f32 %v247, %v257
      %v268 = vadd.f32 %v248, %v257
      %v269 = vadd.f32 %v249, %v257
      %v270 = vadd.f32 %v250, %v257
      %v271 = vadd.f32 %v251, %v257
      %v272 = vadd.f32 %v252, %v257
      %v273 = vadd.f32 %v253, %v257
      %v274 = vmax.f32 %v258, 0.0
      %v275 = vmax.f32 %v259, 0.0
      %v276 = vmax.f32 %v260, 0.0
      %v277 = vmax.f32 %v261, 0.0
      %v278 = vmax.f32 %v262, 0.0
      %v279 = vmax.f32 %v263, 0.0
      %v280 = vmax.f32 %v264, 0.0
      %v281 = vmax.f32 %v265, 0.0
      %v282 = vmax.f32 %v266, 0.0
      %v283 = vmax.f32 %v267, 0.0
      %v284 = vmax.f32 %v268, 0.0
      %v285 = vmax.f32 %v269, 0.0
      %v286 = vmax.f32 %v270, 0.0
      %v287 = vmax.f32 %v271, 0.0
      %v288 = vmax.f32 %v272, 0.0
      %v289 = vmax.f32 %v273, 0.0
      %v290 = vlaneseq
      %v291 = vshrl.u32 %v290, 7
      %v292 = vadd.s32 %v291, 8
      %v293 = vadd.s32 %v291, 16
      %v294 = vadd.s32 %v291, 24
      %v295 = vadd.s32 %v291, 32
      %v296 = vadd.s32 %v291, 40
      %v297 = vadd.s32 %v291, 48
      %v298 = vadd.s32 %v291, 56
      %v299 = vld [vmem:[%s2] sm:$0xff]
      %v300 = vld [vmem:[%s2 + $0x8] sm:$0xff]
      %v301 = vld [vmem:[%s2 + $0x10] sm:$0xff]
      %v302 = vld [vmem:[%s2 + $0x18] sm:$0xff]
      %v303 = vld [vmem:[%s2 + $0x20] sm:$0xff]
      %v304 = vld [vmem:[%s2 + $0x28] sm:$0xff]
      %v305 = vld [vmem:[%s2 + $0x30] sm:$0xff]
      %v306 = vld [vmem:[%s2 + $0x38] sm:$0xff]
      %v307 = vld [vmem:[%s2 + $0x40] sm:$0xff]
      %v308 = vld [vmem:[%s2 + $0x48] sm:$0xff]
      %v309 = vld [vmem:[%s2 + $0x50] sm:$0xff]
      %v310 = vld [vmem:[%s2 + $0x58] sm:$0xff]
      %v311 = vld [vmem:[%s2 + $0x60] sm:$0xff]
      %v312 = vld [vmem:[%s2 + $0x68] sm:$0xff]
      %v313 = vld [vmem:[%s2 + $0x70] sm:$0xff]
      %v314 = vld [vmem:[%s2 + $0x78] sm:$0xff]
      %v315 = vld [vmem:[%s2 + $0x80] sm:$0xff]
      %v316 = vld [vmem:[%s2 + $0x88] sm:$0xff]
      %v317 = vld [vmem:[%s2 + $0x90] sm:$0xff]
      %v318 = vld [vmem:[%s2 + $0x98] sm:$0xff]
      %v319 = vld [vmem:[%s2 + $0xa0] sm:$0xff]
      %v320 = vld [vmem:[%s2 + $0xa8] sm:$0xff]
      %v321 = vld [vmem:[%s2 + $0xb0] sm:$0xff]
      %v322 = vld [vmem:[%s2 + $0xb8] sm:$0xff]
      %v323 = vld [vmem:[%s2 + $0xc0] sm:$0xff]
      %v324 = vld [vmem:[%s2 + $0xc8] sm:$0xff]
      %v325 = vld [vmem:[%s2 + $0xd0] sm:$0xff]
      %v326 = vld [vmem:[%s2 + $0xd8] sm:$0xff]
      %v327 = vld [vmem:[%s2 + $0xe0] sm:$0xff]
      %v328 = vld [vmem:[%s2 + $0xe8] sm:$0xff]
      %v329 = vld [vmem:[%s2 + $0xf0] sm:$0xff]
      %v330 = vld [vmem:[%s2 + $0xf8] sm:$0xff]
      %v331 = vld [vmem:[%s2 + $0x100] sm:$0xff]
      %v332 = vld [vmem:[%s2 + $0x108] sm:$0xff]
      %v333 = vld [vmem:[%s2 + $0x110] sm:$0xff]
      %v334 = vld [vmem:[%s2 + $0x118] sm:$0xff]
      %v335 = vld [vmem:[%s2 + $0x120] sm:$0xff]
      %v336 = vld [vmem:[%s2 + $0x128] sm:$0xff]
      %v337 = vld [vmem:[%s2 + $0x130] sm:$0xff]
      %v338 = vld [vmem:[%s2 + $0x138] sm:$0xff]
      %v339 = vld [vmem:[%s2 + $0x140] sm:$0xff]
      %v340 = vld [vmem:[%s2 + $0x148] sm:$0xff]
      %v341 = vld [vmem:[%s2 + $0x150] sm:$0xff]
      %v342 = vld [vmem:[%s2 + $0x158] sm:$0xff]
      %v343 = vld [vmem:[%s2 + $0x160] sm:$0xff]
      %v344 = vld [vmem:[%s2 + $0x168] sm:$0xff]
      %v345 = vld [vmem:[%s2 + $0x170] sm:$0xff]
      %v346 = vld [vmem:[%s2 + $0x178] sm:$0xff]
      %347 = vmatprep.subr.mxu0 %v300
      %348 = vmatpush1.msra.mxu0 %v299
      %349 = vmatprep.subr.mxu0 %v303
      %350 = vmatpush1.msra.mxu0 %v302
      %351 = vmatprep.subr.mxu0 %v306
      %352 = vmatpush1.msra.mxu0 %v305
      %353 = vmatprep.subr.mxu0 %v309
      %354 = vmatpush1.msra.mxu0 %v308
      %355 = vmatprep.subr.mxu0 %v312
      %356 = vmatpush1.msra.mxu0 %v311
      %357 = vmatprep.subr.mxu0 %v315
      %358 = vmatpush1.msra.mxu0 %v314
      %359 = vmatprep.subr.mxu0 %v318
      %360 = vmatpush1.msra.mxu0 %v317
      %361 = vmatprep.subr.mxu0 %v321
      %362 = vmatpush1.msra.mxu0 %v320
      %363 = vmatprep.subr.mxu0 %v324
      %364 = vmatpush1.msra.mxu0 %v323
      %365 = vmatprep.subr.mxu0 %v327
      %366 = vmatpush1.msra.mxu0 %v326
      %367 = vmatprep.subr.mxu0 %v330
      %368 = vmatpush1.msra.mxu0 %v329
      %369 = vmatprep.subr.mxu0 %v333
      %370 = vmatpush1.msra.mxu0 %v332
      %371 = vmatprep.subr.mxu0 %v336
      %372 = vmatpush1.msra.mxu0 %v335
      %373 = vmatprep.subr.mxu0 %v339
      %374 = vmatpush1.msra.mxu0 %v338
      %375 = vmatprep.subr.mxu0 %v342
      %376 = vmatpush1.msra.mxu0 %v341
      %377 = vmatprep.subr.mxu0 %v345
      %378 = vmatpush1.msra.mxu0 %v344
      %379 = vmatprep.subr.mxu0 0.0
      %380 = vmatpush1.msra.mxu0 0.0
      %381 = vmatprep.subr.mxu0 0.0
      %382 = vmatpush1.msra.mxu0 0.0
      %383 = vmatprep.subr.mxu0 0.0
      %384 = vmatpush1.msra.mxu0 0.0
      %385 = vmatprep.subr.mxu0 0.0
      %386 = vmatpush1.msra.mxu0 0.0
      %387 = vmatprep.subr.mxu0 0.0
      %388 = vmatpush1.msra.mxu0 0.0
      %389 = vmatprep.subr.mxu0 0.0
      %390 = vmatpush1.msra.mxu0 0.0
      %391 = vmatprep.subr.mxu0 0.0
      %392 = vmatpush1.msra.mxu0 0.0
      %393 = vmatprep.subr.mxu0 0.0
      %394 = vmatpush1.msra.mxu0 0.0
      %395 = vmatprep.subr.mxu0 0.0
      %396 = vmatpush1.msra.mxu0 0.0
      %397 = vmatprep.subr.mxu0 0.0
      %398 = vmatpush1.msra.mxu0 0.0
      %399 = vmatprep.subr.mxu0 0.0
      %400 = vmatpush1.msra.mxu0 0.0
      %401 = vmatprep.subr.mxu0 0.0
      %402 = vmatpush1.msra.mxu0 0.0
      %403 = vmatprep.subr.mxu0 0.0
      %404 = vmatpush1.msra.mxu0 0.0
      %405 = vmatprep.subr.mxu0 0.0
      %406 = vmatpush1.msra.mxu0 0.0
      %407 = vmatprep.subr.mxu0 0.0
      %408 = vmatpush1.msra.mxu0 0.0
      %409 = vmatprep.subr.mxu0 0.0
      %410 = vmatpush1.msra.mxu0 0.0
      %411 = vmatprep.mubr.f32.mxu0 0.0
      %412 = vmatmul.mubr.f32.gmra.mrb[0].mxu0 %v274
      %v413 = vpop.f32.mrb[0].mxu0
      %v414 = vadd.f32 0.0, %v413
      %v415 = vpop.f32.mrb[0].mxu0
      %v416 = vadd.f32 0.0, %v415
      %417 = vmatprep.mubr.f32.mxu0 0.0
      %418 = vmatmul.mubr.f32.gmra.mrb[0].mxu0 %v275
      %v419 = vpop.f32.mrb[0].mxu0
      %v420 = vadd.f32 0.0, %v419
      %v421 = vpop.f32.mrb[0].mxu0
      %v422 = vadd.f32 0.0, %v421
      %423 = vmatprep.mubr.f32.mxu0 0.0
      %424 = vmatmul.mubr.f32.gmra.mrb[0].mxu0 %v276
      %v425 = vpop.f32.mrb[0].mxu0
      %v426 = vadd.f32 0.0, %v425
      %v427 = vpop.f32.mrb[0].mxu0
      %v428 = vadd.f32 0.0, %v427
      %429 = vmatprep.mubr.f32.mxu0 0.0
      %430 = vmatmul.mubr.f32.gmra.mrb[0].mxu0 %v277
      %v431 = vpop.f32.mrb[0].mxu0
      %v432 = vadd.f32 0.0, %v431
      %v433 = vpop.f32.mrb[0].mxu0
      %v434 = vadd.f32 0.0, %v433
      %435 = vmatprep.mubr.f32.mxu0 0.0
      %436 = vmatmul.mubr.f32.gmra.mrb[0].mxu0 %v278
      %v437 = vpop.f32.mrb[0].mxu0
      %v438 = vadd.f32 0.0, %v437
      %v439 = vpop.f32.mrb[0].mxu0
      %v440 = vadd.f32 0.0, %v439
      %441 = vmatprep.mubr.f32.mxu0 0.0
      %442 = vmatmul.mubr.f32.gmra.mrb[0].mxu0 %v279
      %v443 = vpop.f32.mrb[0].mxu0
      %v444 = vadd.f32 0.0, %v443
      %v445 = vpop.f32.mrb[0].mxu0
      %v446 = vadd.f32 0.0, %v445
      %447 = vmatprep.mubr.f32.mxu0 0.0
      %448 = vmatmul.mubr.f32.gmra.mrb[0].mxu0 %v280
      %v449 = vpop.f32.mrb[0].mxu0
      %v450 = vadd.f32 0.0, %v449
      %v451 = vpop.f32.mrb[0].mxu0
      %v452 = vadd.f32 0.0, %v451
      %453 = vmatprep.mubr.f32.mxu0 0.0
      %454 = vmatmul.mubr.f32.gmra.mrb[0].mxu0 %v281
      %v455 = vpop.f32.mrb[0].mxu0
      %v456 = vadd.f32 0.0, %v455
      %v457 = vpop.f32.mrb[0].mxu0
      %v458 = vadd.f32 0.0, %v457
      %459 = vmatprep.mubr.f32.mxu0 0.0
      %460 = vmatmul.mubr.f32.gmra.mrb[0].mxu0 %v282
      %v461 = vpop.f32.mrb[0].mxu0
      %v462 = vadd.f32 0.0, %v461
      %v463 = vpop.f32.mrb[0].mxu0
      %v464 = vadd.f32 0.0, %v463
      %465 = vmatprep.mubr.f32.mxu0 0.0
      %466 = vmatmul.mubr.f32.gmra.mrb[0].mxu0 %v283
      %v467 = vpop.f32.mrb[0].mxu0
      %v468 = vadd.f32 0.0, %v467
      %v469 = vpop.f32.mrb[0].mxu0
      %v470 = vadd.f32 0.0, %v469
      %471 = vmatprep.mubr.f32.mxu0 0.0
      %472 = vmatmul.mubr.f32.gmra.mrb[0].mxu0 %v284
      %v473 = vpop.f32.mrb[0].mxu0
      %v474 = vadd.f32 0.0, %v473
      %v475 = vpop.f32.mrb[0].mxu0
      %v476 = vadd.f32 0.0, %v475
      %477 = vmatprep.mubr.f32.mxu0 0.0
      %478 = vmatmul.mubr.f32.gmra.mrb[0].mxu0 %v285
      %v479 = vpop.f32.mrb[0].mxu0
      %v480 = vadd.f32 0.0, %v479
      %v481 = vpop.f32.mrb[0].mxu0
      %v482 = vadd.f32 0.0, %v481
      %483 = vmatprep.mubr.f32.mxu0 0.0
      %484 = vmatmul.mubr.f32.gmra.mrb[0].mxu0 %v286
      %v485 = vpop.f32.mrb[0].mxu0
      %v486 = vadd.f32 0.0, %v485
      %v487 = vpop.f32.mrb[0].mxu0
      %v488 = vadd.f32 0.0, %v487
      %489 = vmatprep.mubr.f32.mxu0 0.0
      %490 = vmatmul.mubr.f32.gmra.mrb[0].mxu0 %v287
      %v491 = vpop.f32.mrb[0].mxu0
      %v492 = vadd.f32 0.0, %v491
      %v493 = vpop.f32.mrb[0].mxu0
      %v494 = vadd.f32 0.0, %v493
      %495 = vmatprep.mubr.f32.mxu0 0.0
      %496 = vmatmul.mubr.f32.gmra.mrb[0].mxu0 %v288
      %v497 = vpop.f32.mrb[0].mxu0
      %v498 = vadd.f32 0.0, %v497
      %v499 = vpop.f32.mrb[0].mxu0
      %v500 = vadd.f32 0.0, %v499
      %501 = vmatprep.mubr.f32.mxu0 0.0
      %502 = vmatmul.mubr.f32.gmra.mrb[0].mxu0 %v289
      %v503 = vpop.f32.mrb[0].mxu0
      %v504 = vadd.f32 0.0, %v503
      %v505 = vpop.f32.mrb[0].mxu0
      %v506 = vadd.f32 0.0, %v505
      %507 = vdwg.mxu0
      %508 = vmatprep.subr.mxu0 0.0
      %509 = vmatpush1.msra.mxu0 %v301
      %510 = vmatprep.subr.mxu0 0.0
      %511 = vmatpush1.msra.mxu0 %v304
      %512 = vmatprep.subr.mxu0 0.0
      %513 = vmatpush1.msra.mxu0 %v307
      %514 = vmatprep.subr.mxu0 0.0
      %515 = vmatpush1.msra.mxu0 %v310
      %516 = vmatprep.subr.mxu0 0.0
      %517 = vmatpush1.msra.mxu0 %v313
      %518 = vmatprep.subr.mxu0 0.0
      %519 = vmatpush1.msra.mxu0 %v316
      %520 = vmatprep.subr.mxu0 0.0
      %521 = vmatpush1.msra.mxu0 %v319
      %522 = vmatprep.subr.mxu0 0.0
      %523 = vmatpush1.msra.mxu0 %v322
      %524 = vmatprep.subr.mxu0 0.0
      %525 = vmatpush1.msra.mxu0 %v325
      %526 = vmatprep.subr.mxu0 0.0
      %527 = vmatpush1.msra.mxu0 %v328
      %528 = vmatprep.subr.mxu0 0.0
      %529 = vmatpush1.msra.mxu0 %v331
      %530 = vmatprep.subr.mxu0 0.0
      %531 = vmatpush1.msra.mxu0 %v334
      %532 = vmatprep.subr.mxu0 0.0
      %533 = vmatpush1.msra.mxu0 %v337
      %534 = vmatprep.subr.mxu0 0.0
      %535 = vmatpush1.msra.mxu0 %v340
      %536 = vmatprep.subr.mxu0 0.0
      %537 = vmatpush1.msra.mxu0 %v343
      %538 = vmatprep.subr.mxu0 0.0
      %539 = vmatpush1.msra.mxu0 %v346
      %540 = vmatprep.subr.mxu0 0.0
      %541 = vmatpush1.msra.mxu0 0.0
      %542 = vmatprep.subr.mxu0 0.0
      %543 = vmatpush1.msra.mxu0 0.0
      %544 = vmatprep.subr.mxu0 0.0
      %545 = vmatpush1.msra.mxu0 0.0
      %546 = vmatprep.subr.mxu0 0.0
      %547 = vmatpush1.msra.mxu0 0.0
      %548 = vmatprep.subr.mxu0 0.0
      %549 = vmatpush1.msra.mxu0 0.0
      %550 = vmatprep.subr.mxu0 0.0
      %551 = vmatpush1.msra.mxu0 0.0
      %552 = vmatprep.subr.mxu0 0.0
      %553 = vmatpush1.msra.mxu0 0.0
      %554 = vmatprep.subr.mxu0 0.0
      %555 = vmatpush1.msra.mxu0 0.0
      %556 = vmatprep.subr.mxu0 0.0
      %557 = vmatpush1.msra.mxu0 0.0
      %558 = vmatprep.subr.mxu0 0.0
      %559 = vmatpush1.msra.mxu0 0.0
      %560 = vmatprep.subr.mxu0 0.0
      %561 = vmatpush1.msra.mxu0 0.0
      %562 = vmatprep.subr.mxu0 0.0
      %563 = vmatpush1.msra.mxu0 0.0
      %564 = vmatprep.subr.mxu0 0.0
      %565 = vmatpush1.msra.mxu0 0.0
      %566 = vmatprep.subr.mxu0 0.0
      %567 = vmatpush1.msra.mxu0 0.0
      %568 = vmatprep.subr.mxu0 0.0
      %569 = vmatpush1.msra.mxu0 0.0
      %570 = vmatprep.subr.mxu0 0.0
      %571 = vmatpush1.msra.mxu0 0.0
      %572 = vmatprep.mubr.f32.mxu0 0.0
      %573 = vmatmul.mubr.f32.gmra.mrb[0].mxu0 %v274
      %v574 = vpop.f32.mrb[0].mxu0
      %v575 = vadd.f32 0.0, %v574
      %v576 = vpop.f32.mrb[0].mxu0
      %577 = vmatprep.mubr.f32.mxu0 0.0
      %578 = vmatmul.mubr.f32.gmra.mrb[0].mxu0 %v275
      %v579 = vpop.f32.mrb[0].mxu0
      %v580 = vadd.f32 0.0, %v579
      %v581 = vpop.f32.mrb[0].mxu0
      %582 = vmatprep.mubr.f32.mxu0 0.0
      %583 = vmatmul.mubr.f32.gmra.mrb[0].mxu0 %v276
      %v584 = vpop.f32.mrb[0].mxu0
      %v585 = vadd.f32 0.0, %v584
      %v586 = vpop.f32.mrb[0].mxu0
      %587 = vmatprep.mubr.f32.mxu0 0.0
      %588 = vmatmul.mubr.f32.gmra.mrb[0].mxu0 %v277
      %v589 = vpop.f32.mrb[0].mxu0
      %v590 = vadd.f32 0.0, %v589
      %v591 = vpop.f32.mrb[0].mxu0
      %592 = vmatprep.mubr.f32.mxu0 0.0
      %593 = vmatmul.mubr.f32.gmra.mrb[0].mxu0 %v278
      %v594 = vpop.f32.mrb[0].mxu0
      %v595 = vadd.f32 0.0, %v594
      %v596 = vpop.f32.mrb[0].mxu0
      %597 = vmatprep.mubr.f32.mxu0 0.0
      %598 = vmatmul.mubr.f32.gmra.mrb[0].mxu0 %v279
      %v599 = vpop.f32.mrb[0].mxu0
      %v600 = vadd.f32 0.0, %v599
      %v601 = vpop.f32.mrb[0].mxu0
      %602 = vmatprep.mubr.f32.mxu0 0.0
      %603 = vmatmul.mubr.f32.gmra.mrb[0].mxu0 %v280
      %v604 = vpop.f32.mrb[0].mxu0
      %v605 = vadd.f32 0.0, %v604
      %v606 = vpop.f32.mrb[0].mxu0
      %607 = vmatprep.mubr.f32.mxu0 0.0
      %608 = vmatmul.mubr.f32.gmra.mrb[0].mxu0 %v281
      %v609 = vpop.f32.mrb[0].mxu0
      %v610 = vadd.f32 0.0, %v609
      %v611 = vpop.f32.mrb[0].mxu0
      %612 = vmatprep.mubr.f32.mxu0 0.0
      %613 = vmatmul.mubr.f32.gmra.mrb[0].mxu0 %v282
      %v614 = vpop.f32.mrb[0].mxu0
      %v615 = vadd.f32 0.0, %v614
      %v616 = vpop.f32.mrb[0].mxu0
      %617 = vmatprep.mubr.f32.mxu0 0.0
      %618 = vmatmul.mubr.f32.gmra.mrb[0].mxu0 %v283
      %v619 = vpop.f32.mrb[0].mxu0
      %v620 = vadd.f32 0.0, %v619
      %v621 = vpop.f32.mrb[0].mxu0
      %622 = vmatprep.mubr.f32.mxu0 0.0
      %623 = vmatmul.mubr.f32.gmra.mrb[0].mxu0 %v284
      %v624 = vpop.f32.mrb[0].mxu0
      %v625 = vadd.f32 0.0, %v624
      %v626 = vpop.f32.mrb[0].mxu0
      %627 = vmatprep.mubr.f32.mxu0 0.0
      %628 = vmatmul.mubr.f32.gmra.mrb[0].mxu0 %v285
      %v629 = vpop.f32.mrb[0].mxu0
      %v630 = vadd.f32 0.0, %v629
      %v631 = vpop.f32.mrb[0].mxu0
      %632 = vmatprep.mubr.f32.mxu0 0.0
      %633 = vmatmul.mubr.f32.gmra.mrb[0].mxu0 %v286
      %v634 = vpop.f32.mrb[0].mxu0
      %v635 = vadd.f32 0.0, %v634
      %v636 = vpop.f32.mrb[0].mxu0
      %637 = vmatprep.mubr.f32.mxu0 0.0
      %638 = vmatmul.mubr.f32.gmra.mrb[0].mxu0 %v287
      %v639 = vpop.f32.mrb[0].mxu0
      %v640 = vadd.f32 0.0, %v639
      %v641 = vpop.f32.mrb[0].mxu0
      %642 = vmatprep.mubr.f32.mxu0 0.0
      %643 = vmatmul.mubr.f32.gmra.mrb[0].mxu0 %v288
      %v644 = vpop.f32.mrb[0].mxu0
      %v645 = vadd.f32 0.0, %v644
      %v646 = vpop.f32.mrb[0].mxu0
      %647 = vmatprep.mubr.f32.mxu0 0.0
      %648 = vmatmul.mubr.f32.gmra.mrb[0].mxu0 %v289
      %v649 = vpop.f32.mrb[0].mxu0
      %v650 = vadd.f32 0.0, %v649
      %v651 = vpop.f32.mrb[0].mxu0
      %652 = vdwg.mxu0
      %v653 = vrot.slane %v414, 7
      %v654 = vrot.slane %v420, 7
      %v655 = vrot.slane %v426, 7
      %v656 = vrot.slane %v432, 7
      %v657 = vrot.slane %v438, 7
      %v658 = vrot.slane %v444, 7
      %v659 = vrot.slane %v450, 7
      %v660 = vrot.slane %v456, 7
      %v661 = vrot.slane %v462, 7
      %v662 = vrot.slane %v468, 7
      %v663 = vrot.slane %v474, 7
      %v664 = vrot.slane %v480, 7
      %v665 = vrot.slane %v486, 7
      %v666 = vrot.slane %v492, 7
      %v667 = vrot.slane %v498, 7
      %v668 = vrot.slane %v504, 7
      %vm669 = vcmp.lt.s32.totalorder %v291, 1
      %v670 = vsel %vm669, %v667, %v668
      %v671 = vsel %vm669, %v666, %v667
      %v672 = vsel %vm669, %v665, %v666
      %v673 = vsel %vm669, %v664, %v665
      %v674 = vsel %vm669, %v663, %v664
      %v675 = vsel %vm669, %v662, %v663
      %v676 = vsel %vm669, %v661, %v662
      %v677 = vsel %vm669, %v660, %v661
      %v678 = vsel %vm669, %v659, %v660
      %v679 = vsel %vm669, %v658, %v659
      %v680 = vsel %vm669, %v657, %v658
      %v681 = vsel %vm669, %v656, %v657
      %v682 = vsel %vm669, %v655, %v656
      %v683 = vsel %vm669, %v654, %v655
      %v684 = vsel %vm669, %v653, %v654
      %v685 = vsel %vm669, %v668, %v653
      %vm686 = vcmp.lt.s32.totalorder %v292, 1
      %vm687 = vcmp.lt.s32.totalorder %v293, 1
      %vm688 = vcmp.lt.s32.totalorder %v294, 1
      %vm689 = vcmp.lt.s32.totalorder %v295, 1
      %vm690 = vcmp.lt.s32.totalorder %v296, 1
      %vm691 = vcmp.lt.s32.totalorder %v297, 1
      %vm692 = vcmp.lt.s32.totalorder %v298, 1
      %v693 = vsel %vm669, 1, 0
      %v694 = vsel %vm686, 1, 0
      %v695 = vsel %vm687, 1, 0
      %v696 = vsel %vm688, 1, 0
      %v697 = vsel %vm689, 1, 0
      %v698 = vsel %vm690, 1, 0
      %v699 = vsel %vm691, 1, 0
      %v700 = vsel %vm692, 1, 0
      %vm701 = vcmp.eq.s32.totalorder %v693, 1
      %vm702 = vcmp.eq.s32.totalorder %v694, 1
      %vm703 = vcmp.eq.s32.totalorder %v695, 1
      %vm704 = vcmp.eq.s32.totalorder %v696, 1
      %vm705 = vcmp.eq.s32.totalorder %v697, 1
      %vm706 = vcmp.eq.s32.totalorder %v698, 1
      %vm707 = vcmp.eq.s32.totalorder %v699, 1
      %vm708 = vcmp.eq.s32.totalorder %v700, 1
      %v709 = vsel %vm701, 0.0, %v685
      %v710 = vsel %vm702, 0.0, %v684
      %v711 = vsel %vm703, 0.0, %v683
      %v712 = vsel %vm704, 0.0, %v682
      %v713 = vsel %vm705, 0.0, %v681
      %v714 = vsel %vm706, 0.0, %v680
      %v715 = vsel %vm707, 0.0, %v679
      %v716 = vsel %vm708, 0.0, %v678
      %v717 = vsel %vm701, 0.0, %v677
      %v718 = vsel %vm702, 0.0, %v676
      %v719 = vsel %vm703, 0.0, %v675
      %v720 = vsel %vm704, 0.0, %v674
      %v721 = vsel %vm705, 0.0, %v673
      %v722 = vsel %vm706, 0.0, %v672
      %v723 = vsel %vm707, 0.0, %v671
      %v724 = vsel %vm708, 0.0, %v670
      %v725 = vadd.f32 %v709, %v416
      %v726 = vadd.f32 %v710, %v422
      %v727 = vadd.f32 %v711, %v428
      %v728 = vadd.f32 %v712, %v434
      %v729 = vadd.f32 %v713, %v440
      %v730 = vadd.f32 %v714, %v446
      %v731 = vadd.f32 %v715, %v452
      %v732 = vadd.f32 %v716, %v458
      %v733 = vadd.f32 %v717, %v464
      %v734 = vadd.f32 %v718, %v470
      %v735 = vadd.f32 %v719, %v476
      %v736 = vadd.f32 %v720, %v482
      %v737 = vadd.f32 %v721, %v488
      %v738 = vadd.f32 %v722, %v494
      %v739 = vadd.f32 %v723, %v500
      %v740 = vadd.f32 %v724, %v506
      %v741 = vrot.slane %v575, 1
      %v742 = vrot.slane %v580, 1
      %v743 = vrot.slane %v585, 1
      %v744 = vrot.slane %v590, 1
      %v745 = vrot.slane %v595, 1
      %v746 = vrot.slane %v600, 1
      %v747 = vrot.slane %v605, 1
      %v748 = vrot.slane %v610, 1
      %v749 = vrot.slane %v615, 1
      %v750 = vrot.slane %v620, 1
      %v751 = vrot.slane %v625, 1
      %v752 = vrot.slane %v630, 1
      %v753 = vrot.slane %v635, 1
      %v754 = vrot.slane %v640, 1
      %v755 = vrot.slane %v645, 1
      %v756 = vrot.slane %v650, 1
      %vm757 = vcmp.lt.s32.totalorder %v291, 7
      %v758 = vsel %vm757, %v755, %v756
      %v759 = vsel %vm757, %v754, %v755
      %v760 = vsel %vm757, %v753, %v754
      %v761 = vsel %vm757, %v752, %v753
      %v762 = vsel %vm757, %v751, %v752
      %v763 = vsel %vm757, %v750, %v751
      %v764 = vsel %vm757, %v749, %v750
      %v765 = vsel %vm757, %v748, %v749
      %v766 = vsel %vm757, %v747, %v748
      %v767 = vsel %vm757, %v746, %v747
      %v768 = vsel %vm757, %v745, %v746
      %v769 = vsel %vm757, %v744, %v745
      %v770 = vsel %vm757, %v743, %v744
      %v771 = vsel %vm757, %v742, %v743
      %v772 = vsel %vm757, %v741, %v742
      %v773 = vsel %vm757, %v756, %v741
      %vm774 = vcmp.ge.s32.totalorder %v291, 63
      %vm775 = vcmp.ge.s32.totalorder %v292, 63
      %vm776 = vcmp.ge.s32.totalorder %v293, 63
      %vm777 = vcmp.ge.s32.totalorder %v294, 63
      %vm778 = vcmp.ge.s32.totalorder %v295, 63
      %vm779 = vcmp.ge.s32.totalorder %v296, 63
      %vm780 = vcmp.ge.s32.totalorder %v297, 63
      %vm781 = vcmp.ge.s32.totalorder %v298, 63
      %v782 = vsel %vm774, 1, 0
      %v783 = vsel %vm775, 1, 0
      %v784 = vsel %vm776, 1, 0
      %v785 = vsel %vm777, 1, 0
      %v786 = vsel %vm778, 1, 0
      %v787 = vsel %vm779, 1, 0
      %v788 = vsel %vm780, 1, 0
      %v789 = vsel %vm781, 1, 0
      %vm790 = vcmp.eq.s32.totalorder %v782, 1
      %vm791 = vcmp.eq.s32.totalorder %v783, 1
      %vm792 = vcmp.eq.s32.totalorder %v784, 1
      %vm793 = vcmp.eq.s32.totalorder %v785, 1
      %vm794 = vcmp.eq.s32.totalorder %v786, 1
      %vm795 = vcmp.eq.s32.totalorder %v787, 1
      %vm796 = vcmp.eq.s32.totalorder %v788, 1
      %vm797 = vcmp.eq.s32.totalorder %v789, 1
      %v798 = vsel %vm790, 0.0, %v772
      %v799 = vsel %vm791, 0.0, %v771
      %v800 = vsel %vm792, 0.0, %v770
      %v801 = vsel %vm793, 0.0, %v769
      %v802 = vsel %vm794, 0.0, %v768
      %v803 = vsel %vm795, 0.0, %v767
      %v804 = vsel %vm796, 0.0, %v766
      %v805 = vsel %vm797, 0.0, %v765
      %v806 = vsel %vm790, 0.0, %v764
      %v807 = vsel %vm791, 0.0, %v763
      %v808 = vsel %vm792, 0.0, %v762
      %v809 = vsel %vm793, 0.0, %v761
      %v810 = vsel %vm794, 0.0, %v760
      %v811 = vsel %vm795, 0.0, %v759
      %v812 = vsel %vm796, 0.0, %v758
      %v813 = vsel %vm797, 0.0, %v773
      %v814 = vadd.f32 %v725, %v798
      %v815 = vadd.f32 %v726, %v799
      %v816 = vadd.f32 %v727, %v800
      %v817 = vadd.f32 %v728, %v801
      %v818 = vadd.f32 %v729, %v802
      %v819 = vadd.f32 %v730, %v803
      %v820 = vadd.f32 %v731, %v804
      %v821 = vadd.f32 %v732, %v805
      %v822 = vadd.f32 %v733, %v806
      %v823 = vadd.f32 %v734, %v807
      %v824 = vadd.f32 %v735, %v808
      %v825 = vadd.f32 %v736, %v809
      %v826 = vadd.f32 %v737, %v810
      %v827 = vadd.f32 %v738, %v811
      %v828 = vadd.f32 %v739, %v812
      %v829 = vadd.f32 %v740, %v813
      %830 = vst [vmem:[%s211] sm:$0xff] %v814
      %831 = vst [vmem:[%s211 + $0x8] sm:$0xff] %v815
      %832 = vst [vmem:[%s211 + $0x10] sm:$0xff] %v816
      %833 = vst [vmem:[%s211 + $0x18] sm:$0xff] %v817
      %834 = vst [vmem:[%s211 + $0x20] sm:$0xff] %v818
      %835 = vst [vmem:[%s211 + $0x28] sm:$0xff] %v819
      %836 = vst [vmem:[%s211 + $0x30] sm:$0xff] %v820
      %837 = vst [vmem:[%s211 + $0x38] sm:$0xff] %v821
      %838 = vst [vmem:[%s211 + $0x40] sm:$0xff] %v822
      %839 = vst [vmem:[%s211 + $0x48] sm:$0xff] %v823
      %840 = vst [vmem:[%s211 + $0x50] sm:$0xff] %v824
      %841 = vst [vmem:[%s211 + $0x58] sm:$0xff] %v825
      %842 = vst [vmem:[%s211 + $0x60] sm:$0xff] %v826
      %843 = vst [vmem:[%s211 + $0x68] sm:$0xff] %v827
      %844 = vst [vmem:[%s211 + $0x70] sm:$0xff] %v828
      %845 = vst [vmem:[%s211 + $0x78] sm:$0xff] %v829
      %v846 = vadd.f32 %v814, %v815
      %v847 = vadd.f32 %v846, %v816
      %v848 = vadd.f32 %v847, %v817
      %v849 = vadd.f32 %v848, %v818
      %v850 = vadd.f32 %v849, %v819
      %v851 = vadd.f32 %v850, %v820
      %v852 = vadd.f32 %v851, %v821
      %v853 = vadd.f32 %v852, %v822
      %v854 = vadd.f32 %v853, %v823
      %v855 = vadd.f32 %v854, %v824
      %v856 = vadd.f32 %v855, %v825
      %v857 = vadd.f32 %v856, %v826
      %v858 = vadd.f32 %v857, %v827
      %v859 = vadd.f32 %v858, %v828
      %v860 = vadd.f32 %v859, %v829
      %v861 = vrot.slane %v860, 4
      %v862 = vadd.f32 %v860, %v861
      %v863 = vrot.slane %v862, 2
      %v864 = vadd.f32 %v862, %v863
      %v865 = vrot.slane %v864, 1
      %v866 = vadd.f32 %v864, %v865
      %v867 = vmul.f32 %v814, %v814
      %v868 = vmul.f32 %v815, %v815
      %v869 = vmul.f32 %v816, %v816
      %v870 = vmul.f32 %v817, %v817
      %v871 = vmul.f32 %v818, %v818
      %v872 = vmul.f32 %v819, %v819
      %v873 = vmul.f32 %v820, %v820
      %v874 = vmul.f32 %v821, %v821
      %v875 = vmul.f32 %v822, %v822
      %v876 = vmul.f32 %v823, %v823
      %v877 = vmul.f32 %v824, %v824
      %v878 = vmul.f32 %v825, %v825
      %v879 = vmul.f32 %v826, %v826
      %v880 = vmul.f32 %v827, %v827
      %v881 = vmul.f32 %v828, %v828
      %v882 = vmul.f32 %v829, %v829
      %v883 = vadd.f32 %v867, %v868
      %v884 = vadd.f32 %v883, %v869
      %v885 = vadd.f32 %v884, %v870
      %v886 = vadd.f32 %v885, %v871
      %v887 = vadd.f32 %v886, %v872
      %v888 = vadd.f32 %v887, %v873
      %v889 = vadd.f32 %v888, %v874
      %v890 = vadd.f32 %v889, %v875
      %v891 = vadd.f32 %v890, %v876
      %v892 = vadd.f32 %v891, %v877
      %v893 = vadd.f32 %v892, %v878
      %v894 = vadd.f32 %v893, %v879
      %v895 = vadd.f32 %v894, %v880
      %v896 = vadd.f32 %v895, %v881
      %v897 = vadd.f32 %v896, %v882
      %v898 = vrot.slane %v897, 4
      %v899 = vadd.f32 %v897, %v898
      %v900 = vrot.slane %v899, 2
      %v901 = vadd.f32 %v899, %v900
      %v902 = vrot.slane %v901, 1
      %v903 = vadd.f32 %v901, %v902
      %vm904 = vcmask 1040384
      %v905 = vsel %vm904, %v866, %v903
      %906 = vst [vmem:[%s216] sm:$0x3] %v905
      %s907 = smul.u32 2, %s16
      %p908 = scmp.lt.s32.totalorder %s907, 3
      %s909 = scalar_select %p908, %s907, 3
      %s910 = smul.addr %s909, 8
      %s911 = smul.addr %s910, 8
      %s912 = scalar_lea.vmem %s3, %s911
      %p913 = scmp.lt.s32.totalorder %s16, 1
      %s914 = scalar_select %p913, %s16, 1
      %s915 = smul.addr %s914, 2
      %s916 = scalar_lea.vmem %s4, %s915
      // Predicated region
      $region33: #{basic_conv_res_block.4} parent=31 // pred_check
        %p917 = pneg %p102
      $region34: #{basic_conv_res_block.4} parent=31 // pred_check_branch
        %919 = sbr.rel (%p917) target = $region36
      $region35: #{basic_conv_res_block.4} parent=31 // pred_region
        %s920 = smul.u32 2, %s16
      $region36: #{basic_conv_res_block.4} parent=31 // pred_fallthru
        _
      // Predicated region
      $region37: #{basic_conv_res_block.4} parent=31 // pred_check
        %p921 = pneg %p128
      $region38: #{basic_conv_res_block.4} parent=31 // pred_check_branch
        %923 = sbr.rel (%p921) target = $region40
      $region39: #{basic_conv_res_block.4} parent=31 // pred_region
        _
      $region40: #{basic_conv_res_block.4} parent=31 // pred_fallthru
        _
    $region32: #{basic_conv_res_block.4} parent=5 // pred_fallthru
      _
    %p924 = scmp.le.s32.totalorder 2, %s11
    // Predicated region
    $region41: #{basic_conv_res_block.4} parent=5 // pred_check
      %p925 = pneg %p924
    $region42: #{basic_conv_res_block.4} parent=5 // pred_check_branch
      %927 = sbr.rel (%p925) target = $region44
    $region43: #{basic_conv_res_block.4} parent=5 // pred_region
      %s928 = ssub.s32 %s11, 2
      // Predicated region
      $region45: #{basic_conv_res_block.4} parent=43 // pred_check
        %p929 = pneg %p108
      $region46: #{basic_conv_res_block.4} parent=43 // pred_check_branch
        %931 = sbr.rel (%p929) target = $region48
      $region47: #{basic_conv_res_block.4} parent=43 // pred_region
        %s932 = smul.u32 2, %s17
        %p933 = scmp.lt.s32.totalorder %s932, 3
        %s934 = scalar_select %p933, %s932, 3
        %s935 = smul.addr %s934, 8
        %s936 = smul.addr %s935, 8
        %s937 = scalar_lea.vmem %s3, %s936
      $region48: #{basic_conv_res_block.4} parent=43 // pred_fallthru
        _
      // Predicated region
      $region49: #{basic_conv_res_block.4} parent=43 // pred_check
        %p938 = pneg %p134
      $region50: #{basic_conv_res_block.4} parent=43 // pred_check_branch
        %940 = sbr.rel (%p938) target = $region52
      $region51: #{basic_conv_res_block.4} parent=43 // pred_region
        %p941 = scmp.lt.s32.totalorder %s17, 1
        %s942 = scalar_select %p941, %s17, 1
        %s943 = smul.addr %s942, 2
        %s944 = scalar_lea.vmem %s4, %s943
      $region52: #{basic_conv_res_block.4} parent=43 // pred_fallthru
        _
    $region44: #{basic_conv_res_block.4} parent=5 // pred_fallthru
      _
  $region6: #{basic_conv_res_block.4} parent=0 // loop_footer
    %s15 = sadd.s32 1, %s11
  $region7: #{basic_conv_res_block.4} parent=0 // loop_footer_branch
    %10 = sbr.rel target = $region3
  $region8: #{basic_conv_res_block.4} parent=0 // loop_exit
    _

</llo_original>
